<compile_context>
chip_gen: v7x
topology: tpu7x:2x2x1
jax: 0.10.0
libtpu: 0.0.40
codegen_flags: <defaults>
</compile_context>

<pallas_src>
import functools

import jax
import jax.numpy as jnp
import numpy as np
from jax.experimental import pallas as pl
from jax.experimental.pallas import tpu as pltpu


# -----------------------------------------------------------------------------
# Faithful module semantics: decoder.forward() takes no inputs, returns None.
# -----------------------------------------------------------------------------
class Decoder:
    """JAX counterpart of the (empty) PyTorch `decoder` module."""

    def __init__(self) -> None:
        # nn.Module.__init__ registers no parameters -> nothing to init here.
        pass

    def forward(self):
        # Exact semantics of the reference: takes no inputs, returns None.
        return None

    __call__ = forward


def decoder_forward():
    """Functional wrapper matching decoder().forward()."""
    return Decoder()()


# -----------------------------------------------------------------------------
# Structural Pallas kernel (identity copy), tuned for HBM bandwidth.
# -----------------------------------------------------------------------------
def _copy_kernel(x_ref, o_ref):
    # Whole-tile copy: the only "compute" available for an empty forward.
    o_ref[...] = x_ref[...]


def _vmem_capacity_bytes() -> int:
    try:
        return int(pltpu.get_tpu_info().vmem_capacity_bytes)
    except Exception:
        return 64 << 20  # conservative fallback (v7x per-TC physical VMEM)


def _pick_tile(M: int, N: int, itemsize: int):
    """Pick a large, lane-dense tile that fits the double-buffered VMEM budget."""
    # Per-tile budget: <= 4 MiB and <= 1/16 of physical VMEM, so the
    # 2 (in) + 2 (out) double-buffered tiles use at most ~1/4 of VMEM.
    # Safe on v7x's 64 MiB as well as v5e/v6e's 128 MiB.
    budget = min(4 << 20, _vmem_capacity_bytes() // 16)

    # Lane (last) dim: keep it wide — a large multiple of 128, or full extent
    # (full-extent blocks are always legal, even for small / ragged N).
    tn = N if N <= 1024 else 1024

    # Sublane dim: as many rows as the budget allows, multiple of 8.
    max_rows = max(8, budget // max(1, tn * itemsize))
    if M <= max_rows:
        tm = M
    else:
        tm = min(512, max(8, (max_rows // 8) * 8))

    # Keep >= 2 grid steps along a parallel axis so both v7x TensorCores
    # drive HBM concurrently (avoid collapsing the grid to a single step).
    if tm == M and tn == N and M >= 16 and (M % 16) == 0:
        tm = max(8, ((M // 2) // 8) * 8)

    return tm, tn


def _build_identity(shape, dtype, *, alias: bool):
    M, N = shape
    itemsize = jnp.dtype(dtype).itemsize
    tm, tn = _pick_tile(M, N, itemsize)
    grid = (pl.cdiv(M, tm), pl.cdiv(N, tn))
    return pl.pallas_call(
        _copy_kernel,
        out_shape=jax.ShapeDtypeStruct((M, N), dtype),
        grid=grid,
        in_specs=[pl.BlockSpec((tm, tn), lambda i, j: (i, j))],
        out_specs=pl.BlockSpec((tm, tn), lambda i, j: (i, j)),
        input_output_aliases=({0: 0} if alias else {}),
        compiler_params=pltpu.CompilerParams(
            dimension_semantics=("parallel", "parallel"),
            vmem_limit_bytes=32 << 20,
        ),
    )


def identity_copy(x: jax.Array) -> jax.Array:
    """Tiled identity copy through VMEM with large lane-dense tiles."""
    return _build_identity(x.shape, x.dtype, alias=False)(x)


@functools.partial(jax.jit, donate_argnums=(0,))
def identity_alias(x: jax.Array) -> jax.Array:
    """Zero-data-movement identity: output aliases the (donated) input buffer."""
    return _build_identity(x.shape, x.dtype, alias=True)(x)


if __name__ == "__main__":
    # Faithful forward: no inputs, returns None (matches PyTorch `pass`).
    result = decoder_forward()
    assert result is None, "decoder.forward() must return None"

    # Structural Pallas check on a deterministic input.
    key = jax.random.PRNGKey(0)
    x = jax.random.normal(key, (1024, 1024), dtype=jnp.float32)
    x_host = jax.device_get(x)  # host copy: survives the donation below

    # Path 1: optimized big-tile copy (no aliasing) -> verify bit-exactness.
    y = identity_copy(x)
    jax.block_until_ready(y)
    assert jnp.array_equal(y, x), "identity kernel mismatch"

    # Path 2: aliased + donated path -> zero HBM traffic for the identity.
    y2 = identity_alias(x)  # `x` is donated; do not use it after this call
    jax.block_until_ready(y2)
    assert np.array_equal(np.asarray(jax.device_get(y2)), x_host), (
        "aliased identity mismatch"
    )

    print("KERNEL_OK")
</pallas_src>

<mosaic_0001>
module attributes {stable_mosaic.version = 11 : i64} {
  func.func @_copy_kernel(%arg0: i32, %arg1: i32, %arg2: memref<512x1024xf32, #tpu.memory_space<vmem>>, %arg3: memref<512x1024xf32, #tpu.memory_space<vmem>>) attributes {dimension_semantics = [#tpu.dimension_semantics<parallel>, #tpu.dimension_semantics<parallel>], iteration_bounds = array<i64: 2, 1>, scalar_prefetch = 0 : i64, scratch_operands = 0 : i64, tpu.core_type = #tpu.core_type<tc>, window_params = [{transform_indices = @transform_0, window_bounds = array<i64: 512, 1024>}, {transform_indices = @transform_1, window_bounds = array<i64: 512, 1024>}]} {
    %c0 = arith.constant 0 : index
    %c0_0 = arith.constant 0 : index
    %0 = vector.load %arg2[%c0, %c0_0] : memref<512x1024xf32, #tpu.memory_space<vmem>>, vector<512x1024xf32>
    %c0_1 = arith.constant 0 : index
    %c0_2 = arith.constant 0 : index
    %1 = vector.load %arg3[%c0_1, %c0_2] : memref<512x1024xf32, #tpu.memory_space<vmem>>, vector<512x1024xf32>
    tpu.vector_store %arg3[%c0_1, %c0_2], %0 {strides = array<i32>} : memref<512x1024xf32, #tpu.memory_space<vmem>>, vector<512x1024xf32>,
    return
  }
  func.func @transform_0(%arg0: i32, %arg1: i32) -> (i32, i32) {
    %c0_i32 = arith.constant 0 : i32
    return %arg0, %arg1 : i32, i32
  }
  func.func @transform_1(%arg0: i32, %arg1: i32) -> (i32, i32) {
    %c0_i32 = arith.constant 0 : i32
    return %arg0, %arg1 : i32, i32
  }
}

</mosaic_0001>

<llo_original>
// kernel: tpu_custom_call.1
$region0: #{tpu_custom_call.1}
  #allocation0 [shape = 'u32[]', space=smem, size = 0x4, offset = 0x4, fixed_abs, tag = 'smem constant byte address 0x4 - core index']
  #allocation1 [shape = 'u32[144,128]{1,0:T(1,128)}', space=vmem, size = 0x12000, scoped, tag = 'internal scratch']
  %s0 = inlined_call_operand.hbm [shape: f32[1024,1024], index: 0, kind: input, shape index: {}]
  %s1 = inlined_call_operand.hbm [shape: f32[1024,1024], index: 1, kind: output, shape index: {}]
  %s2 = sld [smem:[#allocation0]]
  $region41: #{tpu_custom_call.1} parent=0
    _
  %s4 = ssub.s32 1, %s2
  %s5 = scalar_select 0, %s4, %s2
  $region1: #{tpu_custom_call.1} parent=0
    #allocation2 [shape = 'u8[4194304]{0}', space=vmem, size = 0x400000, scoped, tag = 'input window, operand 0']
    #allocation3 [shape = 's32[2]{0}', space=sflag, size = 0x8, scoped, tag = 'scoped memory for tpu_custom_call.1']
    #allocation4 [shape = 's32[2]{0}', space=sflag, size = 0x8, scoped, tag = 'scoped memory for tpu_custom_call.1']
    #allocation5 [shape = 'u8[4194304]{0}', space=vmem, size = 0x400000, scoped, tag = 'output window, operand 0']
    %6 = vsyncpa [#allocation3], 0
    %s7 = scalar_lea.sflag [#allocation3], 1
    %8 = vsyncpa %s7, 0
    %9 = vsyncpa [#allocation4], 0
    %s10 = scalar_lea.sflag [#allocation4], 1
    %11 = vsyncpa %s10, 0
    loop: start=0, step=1, limit=4
    $region2: #{tpu_custom_call.1} parent=1 // loop_pre_header
      _
    $region3: #{tpu_custom_call.1} parent=1 // loop_header
      %s13 = sphi 0, %s17
      %p14 = scmp.ge.s32.totalorder %s13, 4
      %s20 = sphi 0, %s32
      %s21 = sphi 0, %s28
      %s22 = sphi 0, %s20
      %s23 = sphi 0, %s21
      %s24 = sphi 0, %s22
      %s25 = sphi 0, %s23
      %s37 = sphi 0, %s39
      %s40 = sphi 0, %s37
      %s41 = sphi 0, %s40
      %s57 = sphi 0, %s41
      %s65 = sphi 0, %s67
      %s68 = sphi 0, %s65
      %s69 = sphi 0, %s68
      %s85 = sphi 0, %s69
    $region4: #{tpu_custom_call.1} parent=1 // loop_header_branch
      %16 = sbr.rel (%p14) target = $region8
    $region5: #{tpu_custom_call.1} parent=1 // loop_body
      %s18 = ssub.s32 %s13, 1
      %s19 = ssub.s32 %s13, 2
      %s26 = sadd.s32 1, %s21
      %p27 = scmp.ge.s32.totalorder %s26, 1
      %s28 = scalar_select %p27, 0, %s26
      %s29 = sadd.s32 1, %s20
      %s30 = scalar_select %p27, %s29, %s20
      %p31 = scmp.ge.s32.totalorder %s30, 2
      %s32 = scalar_select %p31, 0, %s30
      %s33 = ssub.s32 %s20, %s32
      %s34 = ssub.s32 %s21, %s28
      %s35 = sor.u32 %s33, %s34
      %p36 = scmp.eq.s32.totalorder %s35, 0
      %s38 = sadd.s32 %s37, 1
      %s39 = scalar_select %p36, %s37, %s38
      %p42 = pneg %p36
      %p43 = scmp.eq.s32.totalorder %s13, 1
      %p44 = por %p42, %p43
      %p45 = scmp.ne.s32.totalorder %s37, %s40
      %p46 = scmp.eq.s32.totalorder %s13, 0
      %p47 = por %p45, %p46
      %p48 = scmp.ne.s32.totalorder %s37, %s40
      %p49 = scmp.eq.s32.totalorder %s18, 1
      %p50 = por %p48, %p49
      %p51 = scmp.ne.s32.totalorder %s40, %s41
      %p52 = scmp.eq.s32.totalorder %s18, 0
      %p53 = por %p51, %p52
      %p54 = scmp.ne.s32.totalorder %s40, %s41
      %p55 = scmp.eq.s32.totalorder %s19, 1
      %p56 = por %p54, %p55
      %p58 = scmp.ne.s32.totalorder %s41, %s57
      %p59 = scmp.eq.s32.totalorder %s19, 0
      %p60 = por %p58, %p59
      %s61 = ssub.s32 %s20, %s32
      %s62 = ssub.s32 %s21, %s28
      %s63 = sor.u32 %s61, %s62
      %p64 = scmp.eq.s32.totalorder %s63, 0
      %s66 = sadd.s32 %s65, 1
      %s67 = scalar_select %p64, %s65, %s66
      %p70 = pneg %p64
      %p71 = scmp.eq.s32.totalorder %s13, 1
      %p72 = por %p70, %p71
      %p73 = scmp.ne.s32.totalorder %s65, %s68
      %p74 = scmp.eq.s32.totalorder %s13, 0
      %p75 = por %p73, %p74
      %p76 = scmp.ne.s32.totalorder %s65, %s68
      %p77 = scmp.eq.s32.totalorder %s18, 1
      %p78 = por %p76, %p77
      %p79 = scmp.ne.s32.totalorder %s68, %s69
      %p80 = scmp.eq.s32.totalorder %s18, 0
      %p81 = por %p79, %p80
      %p82 = scmp.ne.s32.totalorder %s68, %s69
      %p83 = scmp.eq.s32.totalorder %s19, 1
      %p84 = por %p82, %p83
      %p86 = scmp.ne.s32.totalorder %s69, %s85
      %p87 = scmp.eq.s32.totalorder %s19, 0
      %p88 = por %p86, %p87
      %p89 = scmp.le.s32.totalorder 1, %s13
      %p90 = scmp.lt.s32.totalorder %s13, 3
      %p91 = pnand %p89, %p90
      %p92 = pneg %p91
      // Predicated region
      $region9: #{tpu_custom_call.1} parent=5 // pred_check
        _
      $region10: #{tpu_custom_call.1} parent=5 // pred_check_branch
        %94 = sbr.rel (%p91) target = $region12
      $region11: #{tpu_custom_call.1} parent=5 // pred_region
        %s95 = ssub.s32 %s13, 1
      $region12: #{tpu_custom_call.1} parent=5 // pred_fallthru
        _
      %p96 = scmp.lt.s32.totalorder %s13, 2
      // Predicated region
      $region13: #{tpu_custom_call.1} parent=5 // pred_check
        %p97 = pneg %p96
      $region14: #{tpu_custom_call.1} parent=5 // pred_check_branch
        %99 = sbr.rel (%p97) target = $region16
      $region15: #{tpu_custom_call.1} parent=5 // pred_region
        // Predicated region
        $region17: #{tpu_custom_call.1} parent=15 // pred_check
          %p100 = pneg %p47
        $region18: #{tpu_custom_call.1} parent=15 // pred_check_branch
          %102 = sbr.rel (%p100) target = $region20
        $region19: #{tpu_custom_call.1} parent=15 // pred_region
          %s103 = sand.u32 %s37, 1
          %s104 = scalar_lea.sflag [#allocation3], %s103
          %s105 = sand.u32 %s37, 1
          %s106 = smul.addr %s105, 4096
          %s107 = scalar_lea.vmem [#allocation2], %s106
          %s108 = smul.u32 64, %s20
          %s109 = smul.u32 8, %s21
          %s111 = ssub.s32 65536, 65536
          %112 = vsyncadd %s104, %s111
          %s113 = smul.addr %s108, 8
          %s114 = sadd.s32 %s109, %s113
          %s115 = smul.addr %s114, 128
          %s116 = scalar_lea.hbm %s0, %s115
          %s117 = sshll.u32 %s107, 4
          %s118 = int_to_ptr.vmem [resolvable:$true] %s117
          %123 = dma.hbm_to_vmem [thread:$0]  %s116, 65536, %s118, %s104, 1024, 1024, 64
        $region20: #{tpu_custom_call.1} parent=15 // pred_fallthru
          _
      $region16: #{tpu_custom_call.1} parent=5 // pred_fallthru
        _
      %p124 = scmp.le.s32.totalorder 1, %s13
      %p125 = scmp.lt.s32.totalorder %s13, 3
      %p126 = pnand %p124, %p125
      %p127 = pneg %p126
      // Predicated region
      $region21: #{tpu_custom_call.1} parent=5 // pred_check
        _
      $region22: #{tpu_custom_call.1} parent=5 // pred_check_branch
        %129 = sbr.rel (%p126) target = $region24
      $region23: #{tpu_custom_call.1} parent=5 // pred_region
        %s130 = ssub.s32 %s13, 1
        %s131 = sand.u32 %s40, 1
        %s132 = scalar_lea.sflag [#allocation3], %s131
        %s133 = sand.u32 %s40, 1
        %s134 = smul.addr %s133, 4096
        %s135 = scalar_lea.vmem [#allocation2], %s134
        // Predicated region
        $region25: #{tpu_custom_call.1} parent=23 // pred_check
          %p136 = pneg %p53
        $region26: #{tpu_custom_call.1} parent=23 // pred_check_branch
          %138 = sbr.rel (%p136) target = $region28
        $region27: #{tpu_custom_call.1} parent=23 // pred_region
          %139 = dma.done %s132, 65536
        $region28: #{tpu_custom_call.1} parent=23 // pred_fallthru
          _
        %s140 = sand.u32 %s40, 1
        %s141 = scalar_lea.sflag [#allocation3], %s140
        %s142 = sand.u32 %s40, 1
        %s143 = smul.addr %s142, 4096
        %s144 = scalar_lea.vmem [#allocation2], %s143
        %p145 = pneg %p53
        %p146 = pneg %p50
        %p147 = pneg %p81
        %p148 = pneg %p78
        %s149 = sand.u32 %s68, 1
        %s150 = scalar_lea.sflag [#allocation4], %s149
        %s151 = sand.u32 %s68, 1
        %s152 = smul.addr %s151, 4096
        %s153 = scalar_lea.vmem [#allocation5], %s152
        %s154 = smul.u32 64, %s22
        %s155 = smul.u32 8, %s23
        %s156 = smul.u32 64, %s22
        %s157 = smul.u32 8, %s23
        %v158 = vld [vmem:[%s135] sm:$0xff]
        %v159 = vld [vmem:[%s135 + $0x8] sm:$0xff]
        %v160 = vld [vmem:[%s135 + $0x10] sm:$0xff]
        %v161 = vld [vmem:[%s135 + $0x18] sm:$0xff]
        %v162 = vld [vmem:[%s135 + $0x20] sm:$0xff]
        %v163 = vld [vmem:[%s135 + $0x28] sm:$0xff]
        %v164 = vld [vmem:[%s135 + $0x30] sm:$0xff]
        %v165 = vld [vmem:[%s135 + $0x38] sm:$0xff]
        %v166 = vld [vmem:[%s135 + $0x40] sm:$0xff]
        %v167 = vld [vmem:[%s135 + $0x48] sm:$0xff]
        %v168 = vld [vmem:[%s135 + $0x50] sm:$0xff]
        %v169 = vld [vmem:[%s135 + $0x58] sm:$0xff]
        %v170 = vld [vmem:[%s135 + $0x60] sm:$0xff]
        %v171 = vld [vmem:[%s135 + $0x68] sm:$0xff]
        %v172 = vld [vmem:[%s135 + $0x70] sm:$0xff]
        %v173 = vld [vmem:[%s135 + $0x78] sm:$0xff]
        %v174 = vld [vmem:[%s135 + $0x80] sm:$0xff]
        %v175 = vld [vmem:[%s135 + $0x88] sm:$0xff]
        %v176 = vld [vmem:[%s135 + $0x90] sm:$0xff]
        %v177 = vld [vmem:[%s135 + $0x98] sm:$0xff]
        %v178 = vld [vmem:[%s135 + $0xa0] sm:$0xff]
        %v179 = vld [vmem:[%s135 + $0xa8] sm:$0xff]
        %v180 = vld [vmem:[%s135 + $0xb0] sm:$0xff]
        %v181 = vld [vmem:[%s135 + $0xb8] sm:$0xff]
        %v182 = vld [vmem:[%s135 + $0xc0] sm:$0xff]
        %v183 = vld [vmem:[%s135 + $0xc8] sm:$0xff]
        %v184 = vld [vmem:[%s135 + $0xd0] sm:$0xff]
        %v185 = vld [vmem:[%s135 + $0xd8] sm:$0xff]
        %v186 = vld [vmem:[%s135 + $0xe0] sm:$0xff]
        %v187 = vld [vmem:[%s135 + $0xe8] sm:$0xff]
        %v188 = vld [vmem:[%s135 + $0xf0] sm:$0xff]
        %v189 = vld [vmem:[%s135 + $0xf8] sm:$0xff]
        %v190 = vld [vmem:[%s135 + $0x100] sm:$0xff]
        %v191 = vld [vmem:[%s135 + $0x108] sm:$0xff]
        %v192 = vld [vmem:[%s135 + $0x110] sm:$0xff]
        %v193 = vld [vmem:[%s135 + $0x118] sm:$0xff]
        %v194 = vld [vmem:[%s135 + $0x120] sm:$0xff]
        %v195 = vld [vmem:[%s135 + $0x128] sm:$0xff]
        %v196 = vld [vmem:[%s135 + $0x130] sm:$0xff]
        %v197 = vld [vmem:[%s135 + $0x138] sm:$0xff]
        %v198 = vld [vmem:[%s135 + $0x140] sm:$0xff]
        %v199 = vld [vmem:[%s135 + $0x148] sm:$0xff]
        %v200 = vld [vmem:[%s135 + $0x150] sm:$0xff]
        %v201 = vld [vmem:[%s135 + $0x158] sm:$0xff]
        %v202 = vld [vmem:[%s135 + $0x160] sm:$0xff]
        %v203 = vld [vmem:[%s135 + $0x168] sm:$0xff]
        %v204 = vld [vmem:[%s135 + $0x170] sm:$0xff]
        %v205 = vld [vmem:[%s135 + $0x178] sm:$0xff]
        %v206 = vld [vmem:[%s135 + $0x180] sm:$0xff]
        %v207 = vld [vmem:[%s135 + $0x188] sm:$0xff]
        %v208 = vld [vmem:[%s135 + $0x190] sm:$0xff]
        %v209 = vld [vmem:[%s135 + $0x198] sm:$0xff]
        %v210 = vld [vmem:[%s135 + $0x1a0] sm:$0xff]
        %v211 = vld [vmem:[%s135 + $0x1a8] sm:$0xff]
        %v212 = vld [vmem:[%s135 + $0x1b0] sm:$0xff]
        %v213 = vld [vmem:[%s135 + $0x1b8] sm:$0xff]
        %v214 = vld [vmem:[%s135 + $0x1c0] sm:$0xff]
        %v215 = vld [vmem:[%s135 + $0x1c8] sm:$0xff]
        %v216 = vld [vmem:[%s135 + $0x1d0] sm:$0xff]
        %v217 = vld [vmem:[%s135 + $0x1d8] sm:$0xff]
        %v218 = vld [vmem:[%s135 + $0x1e0] sm:$0xff]
        %v219 = vld [vmem:[%s135 + $0x1e8] sm:$0xff]
        %v220 = vld [vmem:[%s135 + $0x1f0] sm:$0xff]
        %v221 = vld [vmem:[%s135 + $0x1f8] sm:$0xff]
        %v222 = vld [vmem:[%s135 + $0x200] sm:$0xff]
        %v223 = vld [vmem:[%s135 + $0x208] sm:$0xff]
        %v224 = vld [vmem:[%s135 + $0x210] sm:$0xff]
        %v225 = vld [vmem:[%s135 + $0x218] sm:$0xff]
        %v226 = vld [vmem:[%s135 + $0x220] sm:$0xff]
        %v227 = vld [vmem:[%s135 + $0x228] sm:$0xff]
        %v228 = vld [vmem:[%s135 + $0x230] sm:$0xff]
        %v229 = vld [vmem:[%s135 + $0x238] sm:$0xff]
        %v230 = vld [vmem:[%s135 + $0x240] sm:$0xff]
        %v231 = vld [vmem:[%s135 + $0x248] sm:$0xff]
        %v232 = vld [vmem:[%s135 + $0x250] sm:$0xff]
        %v233 = vld [vmem:[%s135 + $0x258] sm:$0xff]
        %v234 = vld [vmem:[%s135 + $0x260] sm:$0xff]
        %v235 = vld [vmem:[%s135 + $0x268] sm:$0xff]
        %v236 = vld [vmem:[%s135 + $0x270] sm:$0xff]
        %v237 = vld [vmem:[%s135 + $0x278] sm:$0xff]
        %v238 = vld [vmem:[%s135 + $0x280] sm:$0xff]
        %v239 = vld [vmem:[%s135 + $0x288] sm:$0xff]
        %v240 = vld [vmem:[%s135 + $0x290] sm:$0xff]
        %v241 = vld [vmem:[%s135 + $0x298] sm:$0xff]
        %v242 = vld [vmem:[%s135 + $0x2a0] sm:$0xff]
        %v243 = vld [vmem:[%s135 + $0x2a8] sm:$0xff]
        %v244 = vld [vmem:[%s135 + $0x2b0] sm:$0xff]
        %v245 = vld [vmem:[%s135 + $0x2b8] sm:$0xff]
        %v246 = vld [vmem:[%s135 + $0x2c0] sm:$0xff]
        %v247 = vld [vmem:[%s135 + $0x2c8] sm:$0xff]
        %v248 = vld [vmem:[%s135 + $0x2d0] sm:$0xff]
        %v249 = vld [vmem:[%s135 + $0x2d8] sm:$0xff]
        %v250 = vld [vmem:[%s135 + $0x2e0] sm:$0xff]
        %v251 = vld [vmem:[%s135 + $0x2e8] sm:$0xff]
        %v252 = vld [vmem:[%s135 + $0x2f0] sm:$0xff]
        %v253 = vld [vmem:[%s135 + $0x2f8] sm:$0xff]
        %v254 = vld [vmem:[%s135 + $0x300] sm:$0xff]
        %v255 = vld [vmem:[%s135 + $0x308] sm:$0xff]
        %v256 = vld [vmem:[%s135 + $0x310] sm:$0xff]
        %v257 = vld [vmem:[%s135 + $0x318] sm:$0xff]
        %v258 = vld [vmem:[%s135 + $0x320] sm:$0xff]
        %v259 = vld [vmem:[%s135 + $0x328] sm:$0xff]
        %v260 = vld [vmem:[%s135 + $0x330] sm:$0xff]
        %v261 = vld [vmem:[%s135 + $0x338] sm:$0xff]
        %v262 = vld [vmem:[%s135 + $0x340] sm:$0xff]
        %v263 = vld [vmem:[%s135 + $0x348] sm:$0xff]
        %v264 = vld [vmem:[%s135 + $0x350] sm:$0xff]
        %v265 = vld [vmem:[%s135 + $0x358] sm:$0xff]
        %v266 = vld [vmem:[%s135 + $0x360] sm:$0xff]
        %v267 = vld [vmem:[%s135 + $0x368] sm:$0xff]
        %v268 = vld [vmem:[%s135 + $0x370] sm:$0xff]
        %v269 = vld [vmem:[%s135 + $0x378] sm:$0xff]
        %v270 = vld [vmem:[%s135 + $0x380] sm:$0xff]
        %v271 = vld [vmem:[%s135 + $0x388] sm:$0xff]
        %v272 = vld [vmem:[%s135 + $0x390] sm:$0xff]
        %v273 = vld [vmem:[%s135 + $0x398] sm:$0xff]
        %v274 = vld [vmem:[%s135 + $0x3a0] sm:$0xff]
        %v275 = vld [vmem:[%s135 + $0x3a8] sm:$0xff]
        %v276 = vld [vmem:[%s135 + $0x3b0] sm:$0xff]
        %v277 = vld [vmem:[%s135 + $0x3b8] sm:$0xff]
        %v278 = vld [vmem:[%s135 + $0x3c0] sm:$0xff]
        %v279 = vld [vmem:[%s135 + $0x3c8] sm:$0xff]
        %v280 = vld [vmem:[%s135 + $0x3d0] sm:$0xff]
        %v281 = vld [vmem:[%s135 + $0x3d8] sm:$0xff]
        %v282 = vld [vmem:[%s135 + $0x3e0] sm:$0xff]
        %v283 = vld [vmem:[%s135 + $0x3e8] sm:$0xff]
        %v284 = vld [vmem:[%s135 + $0x3f0] sm:$0xff]
        %v285 = vld [vmem:[%s135 + $0x3f8] sm:$0xff]
        %v286 = vld [vmem:[%s135 + $0x400] sm:$0xff]
        %v287 = vld [vmem:[%s135 + $0x408] sm:$0xff]
        %v288 = vld [vmem:[%s135 + $0x410] sm:$0xff]
        %v289 = vld [vmem:[%s135 + $0x418] sm:$0xff]
        %v290 = vld [vmem:[%s135 + $0x420] sm:$0xff]
        %v291 = vld [vmem:[%s135 + $0x428] sm:$0xff]
        %v292 = vld [vmem:[%s135 + $0x430] sm:$0xff]
        %v293 = vld [vmem:[%s135 + $0x438] sm:$0xff]
        %v294 = vld [vmem:[%s135 + $0x440] sm:$0xff]
        %v295 = vld [vmem:[%s135 + $0x448] sm:$0xff]
        %v296 = vld [vmem:[%s135 + $0x450] sm:$0xff]
        %v297 = vld [vmem:[%s135 + $0x458] sm:$0xff]
        %v298 = vld [vmem:[%s135 + $0x460] sm:$0xff]
        %v299 = vld [vmem:[%s135 + $0x468] sm:$0xff]
        %v300 = vld [vmem:[%s135 + $0x470] sm:$0xff]
        %v301 = vld [vmem:[%s135 + $0x478] sm:$0xff]
        %v302 = vld [vmem:[%s135 + $0x480] sm:$0xff]
        %v303 = vld [vmem:[%s135 + $0x488] sm:$0xff]
        %v304 = vld [vmem:[%s135 + $0x490] sm:$0xff]
        %v305 = vld [vmem:[%s135 + $0x498] sm:$0xff]
        %v306 = vld [vmem:[%s135 + $0x4a0] sm:$0xff]
        %v307 = vld [vmem:[%s135 + $0x4a8] sm:$0xff]
        %v308 = vld [vmem:[%s135 + $0x4b0] sm:$0xff]
        %v309 = vld [vmem:[%s135 + $0x4b8] sm:$0xff]
        %v310 = vld [vmem:[%s135 + $0x4c0] sm:$0xff]
        %v311 = vld [vmem:[%s135 + $0x4c8] sm:$0xff]
        %v312 = vld [vmem:[%s135 + $0x4d0] sm:$0xff]
        %v313 = vld [vmem:[%s135 + $0x4d8] sm:$0xff]
        %v314 = vld [vmem:[%s135 + $0x4e0] sm:$0xff]
        %v315 = vld [vmem:[%s135 + $0x4e8] sm:$0xff]
        %v316 = vld [vmem:[%s135 + $0x4f0] sm:$0xff]
        %v317 = vld [vmem:[%s135 + $0x4f8] sm:$0xff]
        %v318 = vld [vmem:[%s135 + $0x500] sm:$0xff]
        %v319 = vld [vmem:[%s135 + $0x508] sm:$0xff]
        %v320 = vld [vmem:[%s135 + $0x510] sm:$0xff]
        %v321 = vld [vmem:[%s135 + $0x518] sm:$0xff]
        %v322 = vld [vmem:[%s135 + $0x520] sm:$0xff]
        %v323 = vld [vmem:[%s135 + $0x528] sm:$0xff]
        %v324 = vld [vmem:[%s135 + $0x530] sm:$0xff]
        %v325 = vld [vmem:[%s135 + $0x538] sm:$0xff]
        %v326 = vld [vmem:[%s135 + $0x540] sm:$0xff]
        %v327 = vld [vmem:[%s135 + $0x548] sm:$0xff]
        %v328 = vld [vmem:[%s135 + $0x550] sm:$0xff]
        %v329 = vld [vmem:[%s135 + $0x558] sm:$0xff]
        %v330 = vld [vmem:[%s135 + $0x560] sm:$0xff]
        %v331 = vld [vmem:[%s135 + $0x568] sm:$0xff]
        %v332 = vld [vmem:[%s135 + $0x570] sm:$0xff]
        %v333 = vld [vmem:[%s135 + $0x578] sm:$0xff]
        %v334 = vld [vmem:[%s135 + $0x580] sm:$0xff]
        %v335 = vld [vmem:[%s135 + $0x588] sm:$0xff]
        %v336 = vld [vmem:[%s135 + $0x590] sm:$0xff]
        %v337 = vld [vmem:[%s135 + $0x598] sm:$0xff]
        %v338 = vld [vmem:[%s135 + $0x5a0] sm:$0xff]
        %v339 = vld [vmem:[%s135 + $0x5a8] sm:$0xff]
        %v340 = vld [vmem:[%s135 + $0x5b0] sm:$0xff]
        %v341 = vld [vmem:[%s135 + $0x5b8] sm:$0xff]
        %v342 = vld [vmem:[%s135 + $0x5c0] sm:$0xff]
        %v343 = vld [vmem:[%s135 + $0x5c8] sm:$0xff]
        %v344 = vld [vmem:[%s135 + $0x5d0] sm:$0xff]
        %v345 = vld [vmem:[%s135 + $0x5d8] sm:$0xff]
        %v346 = vld [vmem:[%s135 + $0x5e0] sm:$0xff]
        %v347 = vld [vmem:[%s135 + $0x5e8] sm:$0xff]
        %v348 = vld [vmem:[%s135 + $0x5f0] sm:$0xff]
        %v349 = vld [vmem:[%s135 + $0x5f8] sm:$0xff]
        %v350 = vld [vmem:[%s135 + $0x600] sm:$0xff]
        %v351 = vld [vmem:[%s135 + $0x608] sm:$0xff]
        %v352 = vld [vmem:[%s135 + $0x610] sm:$0xff]
        %v353 = vld [vmem:[%s135 + $0x618] sm:$0xff]
        %v354 = vld [vmem:[%s135 + $0x620] sm:$0xff]
        %v355 = vld [vmem:[%s135 + $0x628] sm:$0xff]
        %v356 = vld [vmem:[%s135 + $0x630] sm:$0xff]
        %v357 = vld [vmem:[%s135 + $0x638] sm:$0xff]
        %v358 = vld [vmem:[%s135 + $0x640] sm:$0xff]
        %v359 = vld [vmem:[%s135 + $0x648] sm:$0xff]
        %v360 = vld [vmem:[%s135 + $0x650] sm:$0xff]
        %v361 = vld [vmem:[%s135 + $0x658] sm:$0xff]
        %v362 = vld [vmem:[%s135 + $0x660] sm:$0xff]
        %v363 = vld [vmem:[%s135 + $0x668] sm:$0xff]
        %v364 = vld [vmem:[%s135 + $0x670] sm:$0xff]
        %v365 = vld [vmem:[%s135 + $0x678] sm:$0xff]
        %v366 = vld [vmem:[%s135 + $0x680] sm:$0xff]
        %v367 = vld [vmem:[%s135 + $0x688] sm:$0xff]
        %v368 = vld [vmem:[%s135 + $0x690] sm:$0xff]
        %v369 = vld [vmem:[%s135 + $0x698] sm:$0xff]
        %v370 = vld [vmem:[%s135 + $0x6a0] sm:$0xff]
        %v371 = vld [vmem:[%s135 + $0x6a8] sm:$0xff]
        %v372 = vld [vmem:[%s135 + $0x6b0] sm:$0xff]
        %v373 = vld [vmem:[%s135 + $0x6b8] sm:$0xff]
        %v374 = vld [vmem:[%s135 + $0x6c0] sm:$0xff]
        %v375 = vld [vmem:[%s135 + $0x6c8] sm:$0xff]
        %v376 = vld [vmem:[%s135 + $0x6d0] sm:$0xff]
        %v377 = vld [vmem:[%s135 + $0x6d8] sm:$0xff]
        %v378 = vld [vmem:[%s135 + $0x6e0] sm:$0xff]
        %v379 = vld [vmem:[%s135 + $0x6e8] sm:$0xff]
        %v380 = vld [vmem:[%s135 + $0x6f0] sm:$0xff]
        %v381 = vld [vmem:[%s135 + $0x6f8] sm:$0xff]
        %v382 = vld [vmem:[%s135 + $0x700] sm:$0xff]
        %v383 = vld [vmem:[%s135 + $0x708] sm:$0xff]
        %v384 = vld [vmem:[%s135 + $0x710] sm:$0xff]
        %v385 = vld [vmem:[%s135 + $0x718] sm:$0xff]
        %v386 = vld [vmem:[%s135 + $0x720] sm:$0xff]
        %v387 = vld [vmem:[%s135 + $0x728] sm:$0xff]
        %v388 = vld [vmem:[%s135 + $0x730] sm:$0xff]
        %v389 = vld [vmem:[%s135 + $0x738] sm:$0xff]
        %v390 = vld [vmem:[%s135 + $0x740] sm:$0xff]
        %v391 = vld [vmem:[%s135 + $0x748] sm:$0xff]
        %v392 = vld [vmem:[%s135 + $0x750] sm:$0xff]
        %v393 = vld [vmem:[%s135 + $0x758] sm:$0xff]
        %v394 = vld [vmem:[%s135 + $0x760] sm:$0xff]
        %v395 = vld [vmem:[%s135 + $0x768] sm:$0xff]
        %v396 = vld [vmem:[%s135 + $0x770] sm:$0xff]
        %v397 = vld [vmem:[%s135 + $0x778] sm:$0xff]
        %v398 = vld [vmem:[%s135 + $0x780] sm:$0xff]
        %v399 = vld [vmem:[%s135 + $0x788] sm:$0xff]
        %v400 = vld [vmem:[%s135 + $0x790] sm:$0xff]
        %v401 = vld [vmem:[%s135 + $0x798] sm:$0xff]
        %v402 = vld [vmem:[%s135 + $0x7a0] sm:$0xff]
        %v403 = vld [vmem:[%s135 + $0x7a8] sm:$0xff]
        %v404 = vld [vmem:[%s135 + $0x7b0] sm:$0xff]
        %v405 = vld [vmem:[%s135 + $0x7b8] sm:$0xff]
        %v406 = vld [vmem:[%s135 + $0x7c0] sm:$0xff]
        %v407 = vld [vmem:[%s135 + $0x7c8] sm:$0xff]
        %v408 = vld [vmem:[%s135 + $0x7d0] sm:$0xff]
        %v409 = vld [vmem:[%s135 + $0x7d8] sm:$0xff]
        %v410 = vld [vmem:[%s135 + $0x7e0] sm:$0xff]
        %v411 = vld [vmem:[%s135 + $0x7e8] sm:$0xff]
        %v412 = vld [vmem:[%s135 + $0x7f0] sm:$0xff]
        %v413 = vld [vmem:[%s135 + $0x7f8] sm:$0xff]
        %v414 = vld [vmem:[%s135 + $0x800] sm:$0xff]
        %v415 = vld [vmem:[%s135 + $0x808] sm:$0xff]
        %v416 = vld [vmem:[%s135 + $0x810] sm:$0xff]
        %v417 = vld [vmem:[%s135 + $0x818] sm:$0xff]
        %v418 = vld [vmem:[%s135 + $0x820] sm:$0xff]
        %v419 = vld [vmem:[%s135 + $0x828] sm:$0xff]
        %v420 = vld [vmem:[%s135 + $0x830] sm:$0xff]
        %v421 = vld [vmem:[%s135 + $0x838] sm:$0xff]
        %v422 = vld [vmem:[%s135 + $0x840] sm:$0xff]
        %v423 = vld [vmem:[%s135 + $0x848] sm:$0xff]
        %v424 = vld [vmem:[%s135 + $0x850] sm:$0xff]
        %v425 = vld [vmem:[%s135 + $0x858] sm:$0xff]
        %v426 = vld [vmem:[%s135 + $0x860] sm:$0xff]
        %v427 = vld [vmem:[%s135 + $0x868] sm:$0xff]
        %v428 = vld [vmem:[%s135 + $0x870] sm:$0xff]
        %v429 = vld [vmem:[%s135 + $0x878] sm:$0xff]
        %v430 = vld [vmem:[%s135 + $0x880] sm:$0xff]
        %v431 = vld [vmem:[%s135 + $0x888] sm:$0xff]
        %v432 = vld [vmem:[%s135 + $0x890] sm:$0xff]
        %v433 = vld [vmem:[%s135 + $0x898] sm:$0xff]
        %v434 = vld [vmem:[%s135 + $0x8a0] sm:$0xff]
        %v435 = vld [vmem:[%s135 + $0x8a8] sm:$0xff]
        %v436 = vld [vmem:[%s135 + $0x8b0] sm:$0xff]
        %v437 = vld [vmem:[%s135 + $0x8b8] sm:$0xff]
        %v438 = vld [vmem:[%s135 + $0x8c0] sm:$0xff]
        %v439 = vld [vmem:[%s135 + $0x8c8] sm:$0xff]
        %v440 = vld [vmem:[%s135 + $0x8d0] sm:$0xff]
        %v441 = vld [vmem:[%s135 + $0x8d8] sm:$0xff]
        %v442 = vld [vmem:[%s135 + $0x8e0] sm:$0xff]
        %v443 = vld [vmem:[%s135 + $0x8e8] sm:$0xff]
        %v444 = vld [vmem:[%s135 + $0x8f0] sm:$0xff]
        %v445 = vld [vmem:[%s135 + $0x8f8] sm:$0xff]
        %v446 = vld [vmem:[%s135 + $0x900] sm:$0xff]
        %v447 = vld [vmem:[%s135 + $0x908] sm:$0xff]
        %v448 = vld [vmem:[%s135 + $0x910] sm:$0xff]
        %v449 = vld [vmem:[%s135 + $0x918] sm:$0xff]
        %v450 = vld [vmem:[%s135 + $0x920] sm:$0xff]
        %v451 = vld [vmem:[%s135 + $0x928] sm:$0xff]
        %v452 = vld [vmem:[%s135 + $0x930] sm:$0xff]
        %v453 = vld [vmem:[%s135 + $0x938] sm:$0xff]
        %v454 = vld [vmem:[%s135 + $0x940] sm:$0xff]
        %v455 = vld [vmem:[%s135 + $0x948] sm:$0xff]
        %v456 = vld [vmem:[%s135 + $0x950] sm:$0xff]
        %v457 = vld [vmem:[%s135 + $0x958] sm:$0xff]
        %v458 = vld [vmem:[%s135 + $0x960] sm:$0xff]
        %v459 = vld [vmem:[%s135 + $0x968] sm:$0xff]
        %v460 = vld [vmem:[%s135 + $0x970] sm:$0xff]
        %v461 = vld [vmem:[%s135 + $0x978] sm:$0xff]
        %v462 = vld [vmem:[%s135 + $0x980] sm:$0xff]
        %v463 = vld [vmem:[%s135 + $0x988] sm:$0xff]
        %v464 = vld [vmem:[%s135 + $0x990] sm:$0xff]
        %v465 = vld [vmem:[%s135 + $0x998] sm:$0xff]
        %v466 = vld [vmem:[%s135 + $0x9a0] sm:$0xff]
        %v467 = vld [vmem:[%s135 + $0x9a8] sm:$0xff]
        %v468 = vld [vmem:[%s135 + $0x9b0] sm:$0xff]
        %v469 = vld [vmem:[%s135 + $0x9b8] sm:$0xff]
        %v470 = vld [vmem:[%s135 + $0x9c0] sm:$0xff]
        %v471 = vld [vmem:[%s135 + $0x9c8] sm:$0xff]
        %v472 = vld [vmem:[%s135 + $0x9d0] sm:$0xff]
        %v473 = vld [vmem:[%s135 + $0x9d8] sm:$0xff]
        %v474 = vld [vmem:[%s135 + $0x9e0] sm:$0xff]
        %v475 = vld [vmem:[%s135 + $0x9e8] sm:$0xff]
        %v476 = vld [vmem:[%s135 + $0x9f0] sm:$0xff]
        %v477 = vld [vmem:[%s135 + $0x9f8] sm:$0xff]
        %v478 = vld [vmem:[%s135 + $0xa00] sm:$0xff]
        %v479 = vld [vmem:[%s135 + $0xa08] sm:$0xff]
        %v480 = vld [vmem:[%s135 + $0xa10] sm:$0xff]
        %v481 = vld [vmem:[%s135 + $0xa18] sm:$0xff]
        %v482 = vld [vmem:[%s135 + $0xa20] sm:$0xff]
        %v483 = vld [vmem:[%s135 + $0xa28] sm:$0xff]
        %v484 = vld [vmem:[%s135 + $0xa30] sm:$0xff]
        %v485 = vld [vmem:[%s135 + $0xa38] sm:$0xff]
        %v486 = vld [vmem:[%s135 + $0xa40] sm:$0xff]
        %v487 = vld [vmem:[%s135 + $0xa48] sm:$0xff]
        %v488 = vld [vmem:[%s135 + $0xa50] sm:$0xff]
        %v489 = vld [vmem:[%s135 + $0xa58] sm:$0xff]
        %v490 = vld [vmem:[%s135 + $0xa60] sm:$0xff]
        %v491 = vld [vmem:[%s135 + $0xa68] sm:$0xff]
        %v492 = vld [vmem:[%s135 + $0xa70] sm:$0xff]
        %v493 = vld [vmem:[%s135 + $0xa78] sm:$0xff]
        %v494 = vld [vmem:[%s135 + $0xa80] sm:$0xff]
        %v495 = vld [vmem:[%s135 + $0xa88] sm:$0xff]
        %v496 = vld [vmem:[%s135 + $0xa90] sm:$0xff]
        %v497 = vld [vmem:[%s135 + $0xa98] sm:$0xff]
        %v498 = vld [vmem:[%s135 + $0xaa0] sm:$0xff]
        %v499 = vld [vmem:[%s135 + $0xaa8] sm:$0xff]
        %v500 = vld [vmem:[%s135 + $0xab0] sm:$0xff]
        %v501 = vld [vmem:[%s135 + $0xab8] sm:$0xff]
        %v502 = vld [vmem:[%s135 + $0xac0] sm:$0xff]
        %v503 = vld [vmem:[%s135 + $0xac8] sm:$0xff]
        %v504 = vld [vmem:[%s135 + $0xad0] sm:$0xff]
        %v505 = vld [vmem:[%s135 + $0xad8] sm:$0xff]
        %v506 = vld [vmem:[%s135 + $0xae0] sm:$0xff]
        %v507 = vld [vmem:[%s135 + $0xae8] sm:$0xff]
        %v508 = vld [vmem:[%s135 + $0xaf0] sm:$0xff]
        %v509 = vld [vmem:[%s135 + $0xaf8] sm:$0xff]
        %v510 = vld [vmem:[%s135 + $0xb00] sm:$0xff]
        %v511 = vld [vmem:[%s135 + $0xb08] sm:$0xff]
        %v512 = vld [vmem:[%s135 + $0xb10] sm:$0xff]
        %v513 = vld [vmem:[%s135 + $0xb18] sm:$0xff]
        %v514 = vld [vmem:[%s135 + $0xb20] sm:$0xff]
        %v515 = vld [vmem:[%s135 + $0xb28] sm:$0xff]
        %v516 = vld [vmem:[%s135 + $0xb30] sm:$0xff]
        %v517 = vld [vmem:[%s135 + $0xb38] sm:$0xff]
        %v518 = vld [vmem:[%s135 + $0xb40] sm:$0xff]
        %v519 = vld [vmem:[%s135 + $0xb48] sm:$0xff]
        %v520 = vld [vmem:[%s135 + $0xb50] sm:$0xff]
        %v521 = vld [vmem:[%s135 + $0xb58] sm:$0xff]
        %v522 = vld [vmem:[%s135 + $0xb60] sm:$0xff]
        %v523 = vld [vmem:[%s135 + $0xb68] sm:$0xff]
        %v524 = vld [vmem:[%s135 + $0xb70] sm:$0xff]
        %v525 = vld [vmem:[%s135 + $0xb78] sm:$0xff]
        %v526 = vld [vmem:[%s135 + $0xb80] sm:$0xff]
        %v527 = vld [vmem:[%s135 + $0xb88] sm:$0xff]
        %v528 = vld [vmem:[%s135 + $0xb90] sm:$0xff]
        %v529 = vld [vmem:[%s135 + $0xb98] sm:$0xff]
        %v530 = vld [vmem:[%s135 + $0xba0] sm:$0xff]
        %v531 = vld [vmem:[%s135 + $0xba8] sm:$0xff]
        %v532 = vld [vmem:[%s135 + $0xbb0] sm:$0xff]
        %v533 = vld [vmem:[%s135 + $0xbb8] sm:$0xff]
        %v534 = vld [vmem:[%s135 + $0xbc0] sm:$0xff]
        %v535 = vld [vmem:[%s135 + $0xbc8] sm:$0xff]
        %v536 = vld [vmem:[%s135 + $0xbd0] sm:$0xff]
        %v537 = vld [vmem:[%s135 + $0xbd8] sm:$0xff]
        %v538 = vld [vmem:[%s135 + $0xbe0] sm:$0xff]
        %v539 = vld [vmem:[%s135 + $0xbe8] sm:$0xff]
        %v540 = vld [vmem:[%s135 + $0xbf0] sm:$0xff]
        %v541 = vld [vmem:[%s135 + $0xbf8] sm:$0xff]
        %v542 = vld [vmem:[%s135 + $0xc00] sm:$0xff]
        %v543 = vld [vmem:[%s135 + $0xc08] sm:$0xff]
        %v544 = vld [vmem:[%s135 + $0xc10] sm:$0xff]
        %v545 = vld [vmem:[%s135 + $0xc18] sm:$0xff]
        %v546 = vld [vmem:[%s135 + $0xc20] sm:$0xff]
        %v547 = vld [vmem:[%s135 + $0xc28] sm:$0xff]
        %v548 = vld [vmem:[%s135 + $0xc30] sm:$0xff]
        %v549 = vld [vmem:[%s135 + $0xc38] sm:$0xff]
        %v550 = vld [vmem:[%s135 + $0xc40] sm:$0xff]
        %v551 = vld [vmem:[%s135 + $0xc48] sm:$0xff]
        %v552 = vld [vmem:[%s135 + $0xc50] sm:$0xff]
        %v553 = vld [vmem:[%s135 + $0xc58] sm:$0xff]
        %v554 = vld [vmem:[%s135 + $0xc60] sm:$0xff]
        %v555 = vld [vmem:[%s135 + $0xc68] sm:$0xff]
        %v556 = vld [vmem:[%s135 + $0xc70] sm:$0xff]
        %v557 = vld [vmem:[%s135 + $0xc78] sm:$0xff]
        %v558 = vld [vmem:[%s135 + $0xc80] sm:$0xff]
        %v559 = vld [vmem:[%s135 + $0xc88] sm:$0xff]
        %v560 = vld [vmem:[%s135 + $0xc90] sm:$0xff]
        %v561 = vld [vmem:[%s135 + $0xc98] sm:$0xff]
        %v562 = vld [vmem:[%s135 + $0xca0] sm:$0xff]
        %v563 = vld [vmem:[%s135 + $0xca8] sm:$0xff]
        %v564 = vld [vmem:[%s135 + $0xcb0] sm:$0xff]
        %v565 = vld [vmem:[%s135 + $0xcb8] sm:$0xff]
        %v566 = vld [vmem:[%s135 + $0xcc0] sm:$0xff]
        %v567 = vld [vmem:[%s135 + $0xcc8] sm:$0xff]
        %v568 = vld [vmem:[%s135 + $0xcd0] sm:$0xff]
        %v569 = vld [vmem:[%s135 + $0xcd8] sm:$0xff]
        %v570 = vld [vmem:[%s135 + $0xce0] sm:$0xff]
        %v571 = vld [vmem:[%s135 + $0xce8] sm:$0xff]
        %v572 = vld [vmem:[%s135 + $0xcf0] sm:$0xff]
        %v573 = vld [vmem:[%s135 + $0xcf8] sm:$0xff]
        %v574 = vld [vmem:[%s135 + $0xd00] sm:$0xff]
        %v575 = vld [vmem:[%s135 + $0xd08] sm:$0xff]
        %v576 = vld [vmem:[%s135 + $0xd10] sm:$0xff]
        %v577 = vld [vmem:[%s135 + $0xd18] sm:$0xff]
        %v578 = vld [vmem:[%s135 + $0xd20] sm:$0xff]
        %v579 = vld [vmem:[%s135 + $0xd28] sm:$0xff]
        %v580 = vld [vmem:[%s135 + $0xd30] sm:$0xff]
        %v581 = vld [vmem:[%s135 + $0xd38] sm:$0xff]
        %v582 = vld [vmem:[%s135 + $0xd40] sm:$0xff]
        %v583 = vld [vmem:[%s135 + $0xd48] sm:$0xff]
        %v584 = vld [vmem:[%s135 + $0xd50] sm:$0xff]
        %v585 = vld [vmem:[%s135 + $0xd58] sm:$0xff]
        %v586 = vld [vmem:[%s135 + $0xd60] sm:$0xff]
        %v587 = vld [vmem:[%s135 + $0xd68] sm:$0xff]
        %v588 = vld [vmem:[%s135 + $0xd70] sm:$0xff]
        %v589 = vld [vmem:[%s135 + $0xd78] sm:$0xff]
        %v590 = vld [vmem:[%s135 + $0xd80] sm:$0xff]
        %v591 = vld [vmem:[%s135 + $0xd88] sm:$0xff]
        %v592 = vld [vmem:[%s135 + $0xd90] sm:$0xff]
        %v593 = vld [vmem:[%s135 + $0xd98] sm:$0xff]
        %v594 = vld [vmem:[%s135 + $0xda0] sm:$0xff]
        %v595 = vld [vmem:[%s135 + $0xda8] sm:$0xff]
        %v596 = vld [vmem:[%s135 + $0xdb0] sm:$0xff]
        %v597 = vld [vmem:[%s135 + $0xdb8] sm:$0xff]
        %v598 = vld [vmem:[%s135 + $0xdc0] sm:$0xff]
        %v599 = vld [vmem:[%s135 + $0xdc8] sm:$0xff]
        %v600 = vld [vmem:[%s135 + $0xdd0] sm:$0xff]
        %v601 = vld [vmem:[%s135 + $0xdd8] sm:$0xff]
        %v602 = vld [vmem:[%s135 + $0xde0] sm:$0xff]
        %v603 = vld [vmem:[%s135 + $0xde8] sm:$0xff]
        %v604 = vld [vmem:[%s135 + $0xdf0] sm:$0xff]
        %v605 = vld [vmem:[%s135 + $0xdf8] sm:$0xff]
        %v606 = vld [vmem:[%s135 + $0xe00] sm:$0xff]
        %v607 = vld [vmem:[%s135 + $0xe08] sm:$0xff]
        %v608 = vld [vmem:[%s135 + $0xe10] sm:$0xff]
        %v609 = vld [vmem:[%s135 + $0xe18] sm:$0xff]
        %v610 = vld [vmem:[%s135 + $0xe20] sm:$0xff]
        %v611 = vld [vmem:[%s135 + $0xe28] sm:$0xff]
        %v612 = vld [vmem:[%s135 + $0xe30] sm:$0xff]
        %v613 = vld [vmem:[%s135 + $0xe38] sm:$0xff]
        %v614 = vld [vmem:[%s135 + $0xe40] sm:$0xff]
        %v615 = vld [vmem:[%s135 + $0xe48] sm:$0xff]
        %v616 = vld [vmem:[%s135 + $0xe50] sm:$0xff]
        %v617 = vld [vmem:[%s135 + $0xe58] sm:$0xff]
        %v618 = vld [vmem:[%s135 + $0xe60] sm:$0xff]
        %v619 = vld [vmem:[%s135 + $0xe68] sm:$0xff]
        %v620 = vld [vmem:[%s135 + $0xe70] sm:$0xff]
        %v621 = vld [vmem:[%s135 + $0xe78] sm:$0xff]
        %v622 = vld [vmem:[%s135 + $0xe80] sm:$0xff]
        %v623 = vld [vmem:[%s135 + $0xe88] sm:$0xff]
        %v624 = vld [vmem:[%s135 + $0xe90] sm:$0xff]
        %v625 = vld [vmem:[%s135 + $0xe98] sm:$0xff]
        %v626 = vld [vmem:[%s135 + $0xea0] sm:$0xff]
        %v627 = vld [vmem:[%s135 + $0xea8] sm:$0xff]
        %v628 = vld [vmem:[%s135 + $0xeb0] sm:$0xff]
        %v629 = vld [vmem:[%s135 + $0xeb8] sm:$0xff]
        %v630 = vld [vmem:[%s135 + $0xec0] sm:$0xff]
        %v631 = vld [vmem:[%s135 + $0xec8] sm:$0xff]
        %v632 = vld [vmem:[%s135 + $0xed0] sm:$0xff]
        %v633 = vld [vmem:[%s135 + $0xed8] sm:$0xff]
        %v634 = vld [vmem:[%s135 + $0xee0] sm:$0xff]
        %v635 = vld [vmem:[%s135 + $0xee8] sm:$0xff]
        %v636 = vld [vmem:[%s135 + $0xef0] sm:$0xff]
        %v637 = vld [vmem:[%s135 + $0xef8] sm:$0xff]
        %v638 = vld [vmem:[%s135 + $0xf00] sm:$0xff]
        %v639 = vld [vmem:[%s135 + $0xf08] sm:$0xff]
        %v640 = vld [vmem:[%s135 + $0xf10] sm:$0xff]
        %v641 = vld [vmem:[%s135 + $0xf18] sm:$0xff]
        %v642 = vld [vmem:[%s135 + $0xf20] sm:$0xff]
        %v643 = vld [vmem:[%s135 + $0xf28] sm:$0xff]
        %v644 = vld [vmem:[%s135 + $0xf30] sm:$0xff]
        %v645 = vld [vmem:[%s135 + $0xf38] sm:$0xff]
        %v646 = vld [vmem:[%s135 + $0xf40] sm:$0xff]
        %v647 = vld [vmem:[%s135 + $0xf48] sm:$0xff]
        %v648 = vld [vmem:[%s135 + $0xf50] sm:$0xff]
        %v649 = vld [vmem:[%s135 + $0xf58] sm:$0xff]
        %v650 = vld [vmem:[%s135 + $0xf60] sm:$0xff]
        %v651 = vld [vmem:[%s135 + $0xf68] sm:$0xff]
        %v652 = vld [vmem:[%s135 + $0xf70] sm:$0xff]
        %v653 = vld [vmem:[%s135 + $0xf78] sm:$0xff]
        %v654 = vld [vmem:[%s135 + $0xf80] sm:$0xff]
        %v655 = vld [vmem:[%s135 + $0xf88] sm:$0xff]
        %v656 = vld [vmem:[%s135 + $0xf90] sm:$0xff]
        %v657 = vld [vmem:[%s135 + $0xf98] sm:$0xff]
        %v658 = vld [vmem:[%s135 + $0xfa0] sm:$0xff]
        %v659 = vld [vmem:[%s135 + $0xfa8] sm:$0xff]
        %v660 = vld [vmem:[%s135 + $0xfb0] sm:$0xff]
        %v661 = vld [vmem:[%s135 + $0xfb8] sm:$0xff]
        %v662 = vld [vmem:[%s135 + $0xfc0] sm:$0xff]
        %v663 = vld [vmem:[%s135 + $0xfc8] sm:$0xff]
        %v664 = vld [vmem:[%s135 + $0xfd0] sm:$0xff]
        %v665 = vld [vmem:[%s135 + $0xfd8] sm:$0xff]
        %v666 = vld [vmem:[%s135 + $0xfe0] sm:$0xff]
        %v667 = vld [vmem:[%s135 + $0xfe8] sm:$0xff]
        %v668 = vld [vmem:[%s135 + $0xff0] sm:$0xff]
        %v669 = vld [vmem:[%s135 + $0xff8] sm:$0xff]
        %670 = vst [vmem:[%s153] sm:$0xff] %v158
        %671 = vst [vmem:[%s153 + $0x8] sm:$0xff] %v159
        %672 = vst [vmem:[%s153 + $0x10] sm:$0xff] %v160
        %673 = vst [vmem:[%s153 + $0x18] sm:$0xff] %v161
        %674 = vst [vmem:[%s153 + $0x20] sm:$0xff] %v162
        %675 = vst [vmem:[%s153 + $0x28] sm:$0xff] %v163
        %676 = vst [vmem:[%s153 + $0x30] sm:$0xff] %v164
        %677 = vst [vmem:[%s153 + $0x38] sm:$0xff] %v165
        %678 = vst [vmem:[%s153 + $0x40] sm:$0xff] %v166
        %679 = vst [vmem:[%s153 + $0x48] sm:$0xff] %v167
        %680 = vst [vmem:[%s153 + $0x50] sm:$0xff] %v168
        %681 = vst [vmem:[%s153 + $0x58] sm:$0xff] %v169
        %682 = vst [vmem:[%s153 + $0x60] sm:$0xff] %v170
        %683 = vst [vmem:[%s153 + $0x68] sm:$0xff] %v171
        %684 = vst [vmem:[%s153 + $0x70] sm:$0xff] %v172
        %685 = vst [vmem:[%s153 + $0x78] sm:$0xff] %v173
        %686 = vst [vmem:[%s153 + $0x80] sm:$0xff] %v174
        %687 = vst [vmem:[%s153 + $0x88] sm:$0xff] %v175
        %688 = vst [vmem:[%s153 + $0x90] sm:$0xff] %v176
        %689 = vst [vmem:[%s153 + $0x98] sm:$0xff] %v177
        %690 = vst [vmem:[%s153 + $0xa0] sm:$0xff] %v178
        %691 = vst [vmem:[%s153 + $0xa8] sm:$0xff] %v179
        %692 = vst [vmem:[%s153 + $0xb0] sm:$0xff] %v180
        %693 = vst [vmem:[%s153 + $0xb8] sm:$0xff] %v181
        %694 = vst [vmem:[%s153 + $0xc0] sm:$0xff] %v182
        %695 = vst [vmem:[%s153 + $0xc8] sm:$0xff] %v183
        %696 = vst [vmem:[%s153 + $0xd0] sm:$0xff] %v184
        %697 = vst [vmem:[%s153 + $0xd8] sm:$0xff] %v185
        %698 = vst [vmem:[%s153 + $0xe0] sm:$0xff] %v186
        %699 = vst [vmem:[%s153 + $0xe8] sm:$0xff] %v187
        %700 = vst [vmem:[%s153 + $0xf0] sm:$0xff] %v188
        %701 = vst [vmem:[%s153 + $0xf8] sm:$0xff] %v189
        %702 = vst [vmem:[%s153 + $0x100] sm:$0xff] %v190
        %703 = vst [vmem:[%s153 + $0x108] sm:$0xff] %v191
        %704 = vst [vmem:[%s153 + $0x110] sm:$0xff] %v192
        %705 = vst [vmem:[%s153 + $0x118] sm:$0xff] %v193
        %706 = vst [vmem:[%s153 + $0x120] sm:$0xff] %v194
        %707 = vst [vmem:[%s153 + $0x128] sm:$0xff] %v195
        %708 = vst [vmem:[%s153 + $0x130] sm:$0xff] %v196
        %709 = vst [vmem:[%s153 + $0x138] sm:$0xff] %v197
        %710 = vst [vmem:[%s153 + $0x140] sm:$0xff] %v198
        %711 = vst [vmem:[%s153 + $0x148] sm:$0xff] %v199
        %712 = vst [vmem:[%s153 + $0x150] sm:$0xff] %v200
        %713 = vst [vmem:[%s153 + $0x158] sm:$0xff] %v201
        %714 = vst [vmem:[%s153 + $0x160] sm:$0xff] %v202
        %715 = vst [vmem:[%s153 + $0x168] sm:$0xff] %v203
        %716 = vst [vmem:[%s153 + $0x170] sm:$0xff] %v204
        %717 = vst [vmem:[%s153 + $0x178] sm:$0xff] %v205
        %718 = vst [vmem:[%s153 + $0x180] sm:$0xff] %v206
        %719 = vst [vmem:[%s153 + $0x188] sm:$0xff] %v207
        %720 = vst [vmem:[%s153 + $0x190] sm:$0xff] %v208
        %721 = vst [vmem:[%s153 + $0x198] sm:$0xff] %v209
        %722 = vst [vmem:[%s153 + $0x1a0] sm:$0xff] %v210
        %723 = vst [vmem:[%s153 + $0x1a8] sm:$0xff] %v211
        %724 = vst [vmem:[%s153 + $0x1b0] sm:$0xff] %v212
        %725 = vst [vmem:[%s153 + $0x1b8] sm:$0xff] %v213
        %726 = vst [vmem:[%s153 + $0x1c0] sm:$0xff] %v214
        %727 = vst [vmem:[%s153 + $0x1c8] sm:$0xff] %v215
        %728 = vst [vmem:[%s153 + $0x1d0] sm:$0xff] %v216
        %729 = vst [vmem:[%s153 + $0x1d8] sm:$0xff] %v217
        %730 = vst [vmem:[%s153 + $0x1e0] sm:$0xff] %v218
        %731 = vst [vmem:[%s153 + $0x1e8] sm:$0xff] %v219
        %732 = vst [vmem:[%s153 + $0x1f0] sm:$0xff] %v220
        %733 = vst [vmem:[%s153 + $0x1f8] sm:$0xff] %v221
        %734 = vst [vmem:[%s153 + $0x200] sm:$0xff] %v222
        %735 = vst [vmem:[%s153 + $0x208] sm:$0xff] %v223
        %736 = vst [vmem:[%s153 + $0x210] sm:$0xff] %v224
        %737 = vst [vmem:[%s153 + $0x218] sm:$0xff] %v225
        %738 = vst [vmem:[%s153 + $0x220] sm:$0xff] %v226
        %739 = vst [vmem:[%s153 + $0x228] sm:$0xff] %v227
        %740 = vst [vmem:[%s153 + $0x230] sm:$0xff] %v228
        %741 = vst [vmem:[%s153 + $0x238] sm:$0xff] %v229
        %742 = vst [vmem:[%s153 + $0x240] sm:$0xff] %v230
        %743 = vst [vmem:[%s153 + $0x248] sm:$0xff] %v231
        %744 = vst [vmem:[%s153 + $0x250] sm:$0xff] %v232
        %745 = vst [vmem:[%s153 + $0x258] sm:$0xff] %v233
        %746 = vst [vmem:[%s153 + $0x260] sm:$0xff] %v234
        %747 = vst [vmem:[%s153 + $0x268] sm:$0xff] %v235
        %748 = vst [vmem:[%s153 + $0x270] sm:$0xff] %v236
        %749 = vst [vmem:[%s153 + $0x278] sm:$0xff] %v237
        %750 = vst [vmem:[%s153 + $0x280] sm:$0xff] %v238
        %751 = vst [vmem:[%s153 + $0x288] sm:$0xff] %v239
        %752 = vst [vmem:[%s153 + $0x290] sm:$0xff] %v240
        %753 = vst [vmem:[%s153 + $0x298] sm:$0xff] %v241
        %754 = vst [vmem:[%s153 + $0x2a0] sm:$0xff] %v242
        %755 = vst [vmem:[%s153 + $0x2a8] sm:$0xff] %v243
        %756 = vst [vmem:[%s153 + $0x2b0] sm:$0xff] %v244
        %757 = vst [vmem:[%s153 + $0x2b8] sm:$0xff] %v245
        %758 = vst [vmem:[%s153 + $0x2c0] sm:$0xff] %v246
        %759 = vst [vmem:[%s153 + $0x2c8] sm:$0xff] %v247
        %760 = vst [vmem:[%s153 + $0x2d0] sm:$0xff] %v248
        %761 = vst [vmem:[%s153 + $0x2d8] sm:$0xff] %v249
        %762 = vst [vmem:[%s153 + $0x2e0] sm:$0xff] %v250
        %763 = vst [vmem:[%s153 + $0x2e8] sm:$0xff] %v251
        %764 = vst [vmem:[%s153 + $0x2f0] sm:$0xff] %v252
        %765 = vst [vmem:[%s153 + $0x2f8] sm:$0xff] %v253
        %766 = vst [vmem:[%s153 + $0x300] sm:$0xff] %v254
        %767 = vst [vmem:[%s153 + $0x308] sm:$0xff] %v255
        %768 = vst [vmem:[%s153 + $0x310] sm:$0xff] %v256
        %769 = vst [vmem:[%s153 + $0x318] sm:$0xff] %v257
        %770 = vst [vmem:[%s153 + $0x320] sm:$0xff] %v258
        %771 = vst [vmem:[%s153 + $0x328] sm:$0xff] %v259
        %772 = vst [vmem:[%s153 + $0x330] sm:$0xff] %v260
        %773 = vst [vmem:[%s153 + $0x338] sm:$0xff] %v261
        %774 = vst [vmem:[%s153 + $0x340] sm:$0xff] %v262
        %775 = vst [vmem:[%s153 + $0x348] sm:$0xff] %v263
        %776 = vst [vmem:[%s153 + $0x350] sm:$0xff] %v264
        %777 = vst [vmem:[%s153 + $0x358] sm:$0xff] %v265
        %778 = vst [vmem:[%s153 + $0x360] sm:$0xff] %v266
        %779 = vst [vmem:[%s153 + $0x368] sm:$0xff] %v267
        %780 = vst [vmem:[%s153 + $0x370] sm:$0xff] %v268
        %781 = vst [vmem:[%s153 + $0x378] sm:$0xff] %v269
        %782 = vst [vmem:[%s153 + $0x380] sm:$0xff] %v270
        %783 = vst [vmem:[%s153 + $0x388] sm:$0xff] %v271
        %784 = vst [vmem:[%s153 + $0x390] sm:$0xff] %v272
        %785 = vst [vmem:[%s153 + $0x398] sm:$0xff] %v273
        %786 = vst [vmem:[%s153 + $0x3a0] sm:$0xff] %v274
        %787 = vst [vmem:[%s153 + $0x3a8] sm:$0xff] %v275
        %788 = vst [vmem:[%s153 + $0x3b0] sm:$0xff] %v276
        %789 = vst [vmem:[%s153 + $0x3b8] sm:$0xff] %v277
        %790 = vst [vmem:[%s153 + $0x3c0] sm:$0xff] %v278
        %791 = vst [vmem:[%s153 + $0x3c8] sm:$0xff] %v279
        %792 = vst [vmem:[%s153 + $0x3d0] sm:$0xff] %v280
        %793 = vst [vmem:[%s153 + $0x3d8] sm:$0xff] %v281
        %794 = vst [vmem:[%s153 + $0x3e0] sm:$0xff] %v282
        %795 = vst [vmem:[%s153 + $0x3e8] sm:$0xff] %v283
        %796 = vst [vmem:[%s153 + $0x3f0] sm:$0xff] %v284
        %797 = vst [vmem:[%s153 + $0x3f8] sm:$0xff] %v285
        %798 = vst [vmem:[%s153 + $0x400] sm:$0xff] %v286
        %799 = vst [vmem:[%s153 + $0x408] sm:$0xff] %v287
        %800 = vst [vmem:[%s153 + $0x410] sm:$0xff] %v288
        %801 = vst [vmem:[%s153 + $0x418] sm:$0xff] %v289
        %802 = vst [vmem:[%s153 + $0x420] sm:$0xff] %v290
        %803 = vst [vmem:[%s153 + $0x428] sm:$0xff] %v291
        %804 = vst [vmem:[%s153 + $0x430] sm:$0xff] %v292
        %805 = vst [vmem:[%s153 + $0x438] sm:$0xff] %v293
        %806 = vst [vmem:[%s153 + $0x440] sm:$0xff] %v294
        %807 = vst [vmem:[%s153 + $0x448] sm:$0xff] %v295
        %808 = vst [vmem:[%s153 + $0x450] sm:$0xff] %v296
        %809 = vst [vmem:[%s153 + $0x458] sm:$0xff] %v297
        %810 = vst [vmem:[%s153 + $0x460] sm:$0xff] %v298
        %811 = vst [vmem:[%s153 + $0x468] sm:$0xff] %v299
        %812 = vst [vmem:[%s153 + $0x470] sm:$0xff] %v300
        %813 = vst [vmem:[%s153 + $0x478] sm:$0xff] %v301
        %814 = vst [vmem:[%s153 + $0x480] sm:$0xff] %v302
        %815 = vst [vmem:[%s153 + $0x488] sm:$0xff] %v303
        %816 = vst [vmem:[%s153 + $0x490] sm:$0xff] %v304
        %817 = vst [vmem:[%s153 + $0x498] sm:$0xff] %v305
        %818 = vst [vmem:[%s153 + $0x4a0] sm:$0xff] %v306
        %819 = vst [vmem:[%s153 + $0x4a8] sm:$0xff] %v307
        %820 = vst [vmem:[%s153 + $0x4b0] sm:$0xff] %v308
        %821 = vst [vmem:[%s153 + $0x4b8] sm:$0xff] %v309
        %822 = vst [vmem:[%s153 + $0x4c0] sm:$0xff] %v310
        %823 = vst [vmem:[%s153 + $0x4c8] sm:$0xff] %v311
        %824 = vst [vmem:[%s153 + $0x4d0] sm:$0xff] %v312
        %825 = vst [vmem:[%s153 + $0x4d8] sm:$0xff] %v313
        %826 = vst [vmem:[%s153 + $0x4e0] sm:$0xff] %v314
        %827 = vst [vmem:[%s153 + $0x4e8] sm:$0xff] %v315
        %828 = vst [vmem:[%s153 + $0x4f0] sm:$0xff] %v316
        %829 = vst [vmem:[%s153 + $0x4f8] sm:$0xff] %v317
        %830 = vst [vmem:[%s153 + $0x500] sm:$0xff] %v318
        %831 = vst [vmem:[%s153 + $0x508] sm:$0xff] %v319
        %832 = vst [vmem:[%s153 + $0x510] sm:$0xff] %v320
        %833 = vst [vmem:[%s153 + $0x518] sm:$0xff] %v321
        %834 = vst [vmem:[%s153 + $0x520] sm:$0xff] %v322
        %835 = vst [vmem:[%s153 + $0x528] sm:$0xff] %v323
        %836 = vst [vmem:[%s153 + $0x530] sm:$0xff] %v324
        %837 = vst [vmem:[%s153 + $0x538] sm:$0xff] %v325
        %838 = vst [vmem:[%s153 + $0x540] sm:$0xff] %v326
        %839 = vst [vmem:[%s153 + $0x548] sm:$0xff] %v327
        %840 = vst [vmem:[%s153 + $0x550] sm:$0xff] %v328
        %841 = vst [vmem:[%s153 + $0x558] sm:$0xff] %v329
        %842 = vst [vmem:[%s153 + $0x560] sm:$0xff] %v330
        %843 = vst [vmem:[%s153 + $0x568] sm:$0xff] %v331
        %844 = vst [vmem:[%s153 + $0x570] sm:$0xff] %v332
        %845 = vst [vmem:[%s153 + $0x578] sm:$0xff] %v333
        %846 = vst [vmem:[%s153 + $0x580] sm:$0xff] %v334
        %847 = vst [vmem:[%s153 + $0x588] sm:$0xff] %v335
        %848 = vst [vmem:[%s153 + $0x590] sm:$0xff] %v336
        %849 = vst [vmem:[%s153 + $0x598] sm:$0xff] %v337
        %850 = vst [vmem:[%s153 + $0x5a0] sm:$0xff] %v338
        %851 = vst [vmem:[%s153 + $0x5a8] sm:$0xff] %v339
        %852 = vst [vmem:[%s153 + $0x5b0] sm:$0xff] %v340
        %853 = vst [vmem:[%s153 + $0x5b8] sm:$0xff] %v341
        %854 = vst [vmem:[%s153 + $0x5c0] sm:$0xff] %v342
        %855 = vst [vmem:[%s153 + $0x5c8] sm:$0xff] %v343
        %856 = vst [vmem:[%s153 + $0x5d0] sm:$0xff] %v344
        %857 = vst [vmem:[%s153 + $0x5d8] sm:$0xff] %v345
        %858 = vst [vmem:[%s153 + $0x5e0] sm:$0xff] %v346
        %859 = vst [vmem:[%s153 + $0x5e8] sm:$0xff] %v347
        %860 = vst [vmem:[%s153 + $0x5f0] sm:$0xff] %v348
        %861 = vst [vmem:[%s153 + $0x5f8] sm:$0xff] %v349
        %862 = vst [vmem:[%s153 + $0x600] sm:$0xff] %v350
        %863 = vst [vmem:[%s153 + $0x608] sm:$0xff] %v351
        %864 = vst [vmem:[%s153 + $0x610] sm:$0xff] %v352
        %865 = vst [vmem:[%s153 + $0x618] sm:$0xff] %v353
        %866 = vst [vmem:[%s153 + $0x620] sm:$0xff] %v354
        %867 = vst [vmem:[%s153 + $0x628] sm:$0xff] %v355
        %868 = vst [vmem:[%s153 + $0x630] sm:$0xff] %v356
        %869 = vst [vmem:[%s153 + $0x638] sm:$0xff] %v357
        %870 = vst [vmem:[%s153 + $0x640] sm:$0xff] %v358
        %871 = vst [vmem:[%s153 + $0x648] sm:$0xff] %v359
        %872 = vst [vmem:[%s153 + $0x650] sm:$0xff] %v360
        %873 = vst [vmem:[%s153 + $0x658] sm:$0xff] %v361
        %874 = vst [vmem:[%s153 + $0x660] sm:$0xff] %v362
        %875 = vst [vmem:[%s153 + $0x668] sm:$0xff] %v363
        %876 = vst [vmem:[%s153 + $0x670] sm:$0xff] %v364
        %877 = vst [vmem:[%s153 + $0x678] sm:$0xff] %v365
        %878 = vst [vmem:[%s153 + $0x680] sm:$0xff] %v366
        %879 = vst [vmem:[%s153 + $0x688] sm:$0xff] %v367
        %880 = vst [vmem:[%s153 + $0x690] sm:$0xff] %v368
        %881 = vst [vmem:[%s153 + $0x698] sm:$0xff] %v369
        %882 = vst [vmem:[%s153 + $0x6a0] sm:$0xff] %v370
        %883 = vst [vmem:[%s153 + $0x6a8] sm:$0xff] %v371
        %884 = vst [vmem:[%s153 + $0x6b0] sm:$0xff] %v372
        %885 = vst [vmem:[%s153 + $0x6b8] sm:$0xff] %v373
        %886 = vst [vmem:[%s153 + $0x6c0] sm:$0xff] %v374
        %887 = vst [vmem:[%s153 + $0x6c8] sm:$0xff] %v375
        %888 = vst [vmem:[%s153 + $0x6d0] sm:$0xff] %v376
        %889 = vst [vmem:[%s153 + $0x6d8] sm:$0xff] %v377
        %890 = vst [vmem:[%s153 + $0x6e0] sm:$0xff] %v378
        %891 = vst [vmem:[%s153 + $0x6e8] sm:$0xff] %v379
        %892 = vst [vmem:[%s153 + $0x6f0] sm:$0xff] %v380
        %893 = vst [vmem:[%s153 + $0x6f8] sm:$0xff] %v381
        %894 = vst [vmem:[%s153 + $0x700] sm:$0xff] %v382
        %895 = vst [vmem:[%s153 + $0x708] sm:$0xff] %v383
        %896 = vst [vmem:[%s153 + $0x710] sm:$0xff] %v384
        %897 = vst [vmem:[%s153 + $0x718] sm:$0xff] %v385
        %898 = vst [vmem:[%s153 + $0x720] sm:$0xff] %v386
        %899 = vst [vmem:[%s153 + $0x728] sm:$0xff] %v387
        %900 = vst [vmem:[%s153 + $0x730] sm:$0xff] %v388
        %901 = vst [vmem:[%s153 + $0x738] sm:$0xff] %v389
        %902 = vst [vmem:[%s153 + $0x740] sm:$0xff] %v390
        %903 = vst [vmem:[%s153 + $0x748] sm:$0xff] %v391
        %904 = vst [vmem:[%s153 + $0x750] sm:$0xff] %v392
        %905 = vst [vmem:[%s153 + $0x758] sm:$0xff] %v393
        %906 = vst [vmem:[%s153 + $0x760] sm:$0xff] %v394
        %907 = vst [vmem:[%s153 + $0x768] sm:$0xff] %v395
        %908 = vst [vmem:[%s153 + $0x770] sm:$0xff] %v396
        %909 = vst [vmem:[%s153 + $0x778] sm:$0xff] %v397
        %910 = vst [vmem:[%s153 + $0x780] sm:$0xff] %v398
        %911 = vst [vmem:[%s153 + $0x788] sm:$0xff] %v399
        %912 = vst [vmem:[%s153 + $0x790] sm:$0xff] %v400
        %913 = vst [vmem:[%s153 + $0x798] sm:$0xff] %v401
        %914 = vst [vmem:[%s153 + $0x7a0] sm:$0xff] %v402
        %915 = vst [vmem:[%s153 + $0x7a8] sm:$0xff] %v403
        %916 = vst [vmem:[%s153 + $0x7b0] sm:$0xff] %v404
        %917 = vst [vmem:[%s153 + $0x7b8] sm:$0xff] %v405
        %918 = vst [vmem:[%s153 + $0x7c0] sm:$0xff] %v406
        %919 = vst [vmem:[%s153 + $0x7c8] sm:$0xff] %v407
        %920 = vst [vmem:[%s153 + $0x7d0] sm:$0xff] %v408
        %921 = vst [vmem:[%s153 + $0x7d8] sm:$0xff] %v409
        %922 = vst [vmem:[%s153 + $0x7e0] sm:$0xff] %v410
        %923 = vst [vmem:[%s153 + $0x7e8] sm:$0xff] %v411
        %924 = vst [vmem:[%s153 + $0x7f0] sm:$0xff] %v412
        %925 = vst [vmem:[%s153 + $0x7f8] sm:$0xff] %v413
        %926 = vst [vmem:[%s153 + $0x800] sm:$0xff] %v414
        %927 = vst [vmem:[%s153 + $0x808] sm:$0xff] %v415
        %928 = vst [vmem:[%s153 + $0x810] sm:$0xff] %v416
        %929 = vst [vmem:[%s153 + $0x818] sm:$0xff] %v417
        %930 = vst [vmem:[%s153 + $0x820] sm:$0xff] %v418
        %931 = vst [vmem:[%s153 + $0x828] sm:$0xff] %v419
        %932 = vst [vmem:[%s153 + $0x830] sm:$0xff] %v420
        %933 = vst [vmem:[%s153 + $0x838] sm:$0xff] %v421
        %934 = vst [vmem:[%s153 + $0x840] sm:$0xff] %v422
        %935 = vst [vmem:[%s153 + $0x848] sm:$0xff] %v423
        %936 = vst [vmem:[%s153 + $0x850] sm:$0xff] %v424
        %937 = vst [vmem:[%s153 + $0x858] sm:$0xff] %v425
        %938 = vst [vmem:[%s153 + $0x860] sm:$0xff] %v426
        %939 = vst [vmem:[%s153 + $0x868] sm:$0xff] %v427
        %940 = vst [vmem:[%s153 + $0x870] sm:$0xff] %v428
        %941 = vst [vmem:[%s153 + $0x878] sm:$0xff] %v429
        %942 = vst [vmem:[%s153 + $0x880] sm:$0xff] %v430
        %943 = vst [vmem:[%s153 + $0x888] sm:$0xff] %v431
        %944 = vst [vmem:[%s153 + $0x890] sm:$0xff] %v432
        %945 = vst [vmem:[%s153 + $0x898] sm:$0xff] %v433
        %946 = vst [vmem:[%s153 + $0x8a0] sm:$0xff] %v434
        %947 = vst [vmem:[%s153 + $0x8a8] sm:$0xff] %v435
        %948 = vst [vmem:[%s153 + $0x8b0] sm:$0xff] %v436
        %949 = vst [vmem:[%s153 + $0x8b8] sm:$0xff] %v437
        %950 = vst [vmem:[%s153 + $0x8c0] sm:$0xff] %v438
        %951 = vst [vmem:[%s153 + $0x8c8] sm:$0xff] %v439
        %952 = vst [vmem:[%s153 + $0x8d0] sm:$0xff] %v440
        %953 = vst [vmem:[%s153 + $0x8d8] sm:$0xff] %v441
        %954 = vst [vmem:[%s153 + $0x8e0] sm:$0xff] %v442
        %955 = vst [vmem:[%s153 + $0x8e8] sm:$0xff] %v443
        %956 = vst [vmem:[%s153 + $0x8f0] sm:$0xff] %v444
        %957 = vst [vmem:[%s153 + $0x8f8] sm:$0xff] %v445
        %958 = vst [vmem:[%s153 + $0x900] sm:$0xff] %v446
        %959 = vst [vmem:[%s153 + $0x908] sm:$0xff] %v447
        %960 = vst [vmem:[%s153 + $0x910] sm:$0xff] %v448
        %961 = vst [vmem:[%s153 + $0x918] sm:$0xff] %v449
        %962 = vst [vmem:[%s153 + $0x920] sm:$0xff] %v450
        %963 = vst [vmem:[%s153 + $0x928] sm:$0xff] %v451
        %964 = vst [vmem:[%s153 + $0x930] sm:$0xff] %v452
        %965 = vst [vmem:[%s153 + $0x938] sm:$0xff] %v453
        %966 = vst [vmem:[%s153 + $0x940] sm:$0xff] %v454
        %967 = vst [vmem:[%s153 + $0x948] sm:$0xff] %v455
        %968 = vst [vmem:[%s153 + $0x950] sm:$0xff] %v456
        %969 = vst [vmem:[%s153 + $0x958] sm:$0xff] %v457
        %970 = vst [vmem:[%s153 + $0x960] sm:$0xff] %v458
        %971 = vst [vmem:[%s153 + $0x968] sm:$0xff] %v459
        %972 = vst [vmem:[%s153 + $0x970] sm:$0xff] %v460
        %973 = vst [vmem:[%s153 + $0x978] sm:$0xff] %v461
        %974 = vst [vmem:[%s153 + $0x980] sm:$0xff] %v462
        %975 = vst [vmem:[%s153 + $0x988] sm:$0xff] %v463
        %976 = vst [vmem:[%s153 + $0x990] sm:$0xff] %v464
        %977 = vst [vmem:[%s153 + $0x998] sm:$0xff] %v465
        %978 = vst [vmem:[%s153 + $0x9a0] sm:$0xff] %v466
        %979 = vst [vmem:[%s153 + $0x9a8] sm:$0xff] %v467
        %980 = vst [vmem:[%s153 + $0x9b0] sm:$0xff] %v468
        %981 = vst [vmem:[%s153 + $0x9b8] sm:$0xff] %v469
        %982 = vst [vmem:[%s153 + $0x9c0] sm:$0xff] %v470
        %983 = vst [vmem:[%s153 + $0x9c8] sm:$0xff] %v471
        %984 = vst [vmem:[%s153 + $0x9d0] sm:$0xff] %v472
        %985 = vst [vmem:[%s153 + $0x9d8] sm:$0xff] %v473
        %986 = vst [vmem:[%s153 + $0x9e0] sm:$0xff] %v474
        %987 = vst [vmem:[%s153 + $0x9e8] sm:$0xff] %v475
        %988 = vst [vmem:[%s153 + $0x9f0] sm:$0xff] %v476
        %989 = vst [vmem:[%s153 + $0x9f8] sm:$0xff] %v477
        %990 = vst [vmem:[%s153 + $0xa00] sm:$0xff] %v478
        %991 = vst [vmem:[%s153 + $0xa08] sm:$0xff] %v479
        %992 = vst [vmem:[%s153 + $0xa10] sm:$0xff] %v480
        %993 = vst [vmem:[%s153 + $0xa18] sm:$0xff] %v481
        %994 = vst [vmem:[%s153 + $0xa20] sm:$0xff] %v482
        %995 = vst [vmem:[%s153 + $0xa28] sm:$0xff] %v483
        %996 = vst [vmem:[%s153 + $0xa30] sm:$0xff] %v484
        %997 = vst [vmem:[%s153 + $0xa38] sm:$0xff] %v485
        %998 = vst [vmem:[%s153 + $0xa40] sm:$0xff] %v486
        %999 = vst [vmem:[%s153 + $0xa48] sm:$0xff] %v487
        %1000 = vst [vmem:[%s153 + $0xa50] sm:$0xff] %v488
        %1001 = vst [vmem:[%s153 + $0xa58] sm:$0xff] %v489
        %1002 = vst [vmem:[%s153 + $0xa60] sm:$0xff] %v490
        %1003 = vst [vmem:[%s153 + $0xa68] sm:$0xff] %v491
        %1004 = vst [vmem:[%s153 + $0xa70] sm:$0xff] %v492
        %1005 = vst [vmem:[%s153 + $0xa78] sm:$0xff] %v493
        %1006 = vst [vmem:[%s153 + $0xa80] sm:$0xff] %v494
        %1007 = vst [vmem:[%s153 + $0xa88] sm:$0xff] %v495
        %1008 = vst [vmem:[%s153 + $0xa90] sm:$0xff] %v496
        %1009 = vst [vmem:[%s153 + $0xa98] sm:$0xff] %v497
        %1010 = vst [vmem:[%s153 + $0xaa0] sm:$0xff] %v498
        %1011 = vst [vmem:[%s153 + $0xaa8] sm:$0xff] %v499
        %1012 = vst [vmem:[%s153 + $0xab0] sm:$0xff] %v500
        %1013 = vst [vmem:[%s153 + $0xab8] sm:$0xff] %v501
        %1014 = vst [vmem:[%s153 + $0xac0] sm:$0xff] %v502
        %1015 = vst [vmem:[%s153 + $0xac8] sm:$0xff] %v503
        %1016 = vst [vmem:[%s153 + $0xad0] sm:$0xff] %v504
        %1017 = vst [vmem:[%s153 + $0xad8] sm:$0xff] %v505
        %1018 = vst [vmem:[%s153 + $0xae0] sm:$0xff] %v506
        %1019 = vst [vmem:[%s153 + $0xae8] sm:$0xff] %v507
        %1020 = vst [vmem:[%s153 + $0xaf0] sm:$0xff] %v508
        %1021 = vst [vmem:[%s153 + $0xaf8] sm:$0xff] %v509
        %1022 = vst [vmem:[%s153 + $0xb00] sm:$0xff] %v510
        %1023 = vst [vmem:[%s153 + $0xb08] sm:$0xff] %v511
        %1024 = vst [vmem:[%s153 + $0xb10] sm:$0xff] %v512
        %1025 = vst [vmem:[%s153 + $0xb18] sm:$0xff] %v513
        %1026 = vst [vmem:[%s153 + $0xb20] sm:$0xff] %v514
        %1027 = vst [vmem:[%s153 + $0xb28] sm:$0xff] %v515
        %1028 = vst [vmem:[%s153 + $0xb30] sm:$0xff] %v516
        %1029 = vst [vmem:[%s153 + $0xb38] sm:$0xff] %v517
        %1030 = vst [vmem:[%s153 + $0xb40] sm:$0xff] %v518
        %1031 = vst [vmem:[%s153 + $0xb48] sm:$0xff] %v519
        %1032 = vst [vmem:[%s153 + $0xb50] sm:$0xff] %v520
        %1033 = vst [vmem:[%s153 + $0xb58] sm:$0xff] %v521
        %1034 = vst [vmem:[%s153 + $0xb60] sm:$0xff] %v522
        %1035 = vst [vmem:[%s153 + $0xb68] sm:$0xff] %v523
        %1036 = vst [vmem:[%s153 + $0xb70] sm:$0xff] %v524
        %1037 = vst [vmem:[%s153 + $0xb78] sm:$0xff] %v525
        %1038 = vst [vmem:[%s153 + $0xb80] sm:$0xff] %v526
        %1039 = vst [vmem:[%s153 + $0xb88] sm:$0xff] %v527
        %1040 = vst [vmem:[%s153 + $0xb90] sm:$0xff] %v528
        %1041 = vst [vmem:[%s153 + $0xb98] sm:$0xff] %v529
        %1042 = vst [vmem:[%s153 + $0xba0] sm:$0xff] %v530
        %1043 = vst [vmem:[%s153 + $0xba8] sm:$0xff] %v531
        %1044 = vst [vmem:[%s153 + $0xbb0] sm:$0xff] %v532
        %1045 = vst [vmem:[%s153 + $0xbb8] sm:$0xff] %v533
        %1046 = vst [vmem:[%s153 + $0xbc0] sm:$0xff] %v534
        %1047 = vst [vmem:[%s153 + $0xbc8] sm:$0xff] %v535
        %1048 = vst [vmem:[%s153 + $0xbd0] sm:$0xff] %v536
        %1049 = vst [vmem:[%s153 + $0xbd8] sm:$0xff] %v537
        %1050 = vst [vmem:[%s153 + $0xbe0] sm:$0xff] %v538
        %1051 = vst [vmem:[%s153 + $0xbe8] sm:$0xff] %v539
        %1052 = vst [vmem:[%s153 + $0xbf0] sm:$0xff] %v540
        %1053 = vst [vmem:[%s153 + $0xbf8] sm:$0xff] %v541
        %1054 = vst [vmem:[%s153 + $0xc00] sm:$0xff] %v542
        %1055 = vst [vmem:[%s153 + $0xc08] sm:$0xff] %v543
        %1056 = vst [vmem:[%s153 + $0xc10] sm:$0xff] %v544
        %1057 = vst [vmem:[%s153 + $0xc18] sm:$0xff] %v545
        %1058 = vst [vmem:[%s153 + $0xc20] sm:$0xff] %v546
        %1059 = vst [vmem:[%s153 + $0xc28] sm:$0xff] %v547
        %1060 = vst [vmem:[%s153 + $0xc30] sm:$0xff] %v548
        %1061 = vst [vmem:[%s153 + $0xc38] sm:$0xff] %v549
        %1062 = vst [vmem:[%s153 + $0xc40] sm:$0xff] %v550
        %1063 = vst [vmem:[%s153 + $0xc48] sm:$0xff] %v551
        %1064 = vst [vmem:[%s153 + $0xc50] sm:$0xff] %v552
        %1065 = vst [vmem:[%s153 + $0xc58] sm:$0xff] %v553
        %1066 = vst [vmem:[%s153 + $0xc60] sm:$0xff] %v554
        %1067 = vst [vmem:[%s153 + $0xc68] sm:$0xff] %v555
        %1068 = vst [vmem:[%s153 + $0xc70] sm:$0xff] %v556
        %1069 = vst [vmem:[%s153 + $0xc78] sm:$0xff] %v557
        %1070 = vst [vmem:[%s153 + $0xc80] sm:$0xff] %v558
        %1071 = vst [vmem:[%s153 + $0xc88] sm:$0xff] %v559
        %1072 = vst [vmem:[%s153 + $0xc90] sm:$0xff] %v560
        %1073 = vst [vmem:[%s153 + $0xc98] sm:$0xff] %v561
        %1074 = vst [vmem:[%s153 + $0xca0] sm:$0xff] %v562
        %1075 = vst [vmem:[%s153 + $0xca8] sm:$0xff] %v563
        %1076 = vst [vmem:[%s153 + $0xcb0] sm:$0xff] %v564
        %1077 = vst [vmem:[%s153 + $0xcb8] sm:$0xff] %v565
        %1078 = vst [vmem:[%s153 + $0xcc0] sm:$0xff] %v566
        %1079 = vst [vmem:[%s153 + $0xcc8] sm:$0xff] %v567
        %1080 = vst [vmem:[%s153 + $0xcd0] sm:$0xff] %v568
        %1081 = vst [vmem:[%s153 + $0xcd8] sm:$0xff] %v569
        %1082 = vst [vmem:[%s153 + $0xce0] sm:$0xff] %v570
        %1083 = vst [vmem:[%s153 + $0xce8] sm:$0xff] %v571
        %1084 = vst [vmem:[%s153 + $0xcf0] sm:$0xff] %v572
        %1085 = vst [vmem:[%s153 + $0xcf8] sm:$0xff] %v573
        %1086 = vst [vmem:[%s153 + $0xd00] sm:$0xff] %v574
        %1087 = vst [vmem:[%s153 + $0xd08] sm:$0xff] %v575
        %1088 = vst [vmem:[%s153 + $0xd10] sm:$0xff] %v576
        %1089 = vst [vmem:[%s153 + $0xd18] sm:$0xff] %v577
        %1090 = vst [vmem:[%s153 + $0xd20] sm:$0xff] %v578
        %1091 = vst [vmem:[%s153 + $0xd28] sm:$0xff] %v579
        %1092 = vst [vmem:[%s153 + $0xd30] sm:$0xff] %v580
        %1093 = vst [vmem:[%s153 + $0xd38] sm:$0xff] %v581
        %1094 = vst [vmem:[%s153 + $0xd40] sm:$0xff] %v582
        %1095 = vst [vmem:[%s153 + $0xd48] sm:$0xff] %v583
        %1096 = vst [vmem:[%s153 + $0xd50] sm:$0xff] %v584
        %1097 = vst [vmem:[%s153 + $0xd58] sm:$0xff] %v585
        %1098 = vst [vmem:[%s153 + $0xd60] sm:$0xff] %v586
        %1099 = vst [vmem:[%s153 + $0xd68] sm:$0xff] %v587
        %1100 = vst [vmem:[%s153 + $0xd70] sm:$0xff] %v588
        %1101 = vst [vmem:[%s153 + $0xd78] sm:$0xff] %v589
        %1102 = vst [vmem:[%s153 + $0xd80] sm:$0xff] %v590
        %1103 = vst [vmem:[%s153 + $0xd88] sm:$0xff] %v591
        %1104 = vst [vmem:[%s153 + $0xd90] sm:$0xff] %v592
        %1105 = vst [vmem:[%s153 + $0xd98] sm:$0xff] %v593
        %1106 = vst [vmem:[%s153 + $0xda0] sm:$0xff] %v594
        %1107 = vst [vmem:[%s153 + $0xda8] sm:$0xff] %v595
        %1108 = vst [vmem:[%s153 + $0xdb0] sm:$0xff] %v596
        %1109 = vst [vmem:[%s153 + $0xdb8] sm:$0xff] %v597
        %1110 = vst [vmem:[%s153 + $0xdc0] sm:$0xff] %v598
        %1111 = vst [vmem:[%s153 + $0xdc8] sm:$0xff] %v599
        %1112 = vst [vmem:[%s153 + $0xdd0] sm:$0xff] %v600
        %1113 = vst [vmem:[%s153 + $0xdd8] sm:$0xff] %v601
        %1114 = vst [vmem:[%s153 + $0xde0] sm:$0xff] %v602
        %1115 = vst [vmem:[%s153 + $0xde8] sm:$0xff] %v603
        %1116 = vst [vmem:[%s153 + $0xdf0] sm:$0xff] %v604
        %1117 = vst [vmem:[%s153 + $0xdf8] sm:$0xff] %v605
        %1118 = vst [vmem:[%s153 + $0xe00] sm:$0xff] %v606
        %1119 = vst [vmem:[%s153 + $0xe08] sm:$0xff] %v607
        %1120 = vst [vmem:[%s153 + $0xe10] sm:$0xff] %v608
        %1121 = vst [vmem:[%s153 + $0xe18] sm:$0xff] %v609
        %1122 = vst [vmem:[%s153 + $0xe20] sm:$0xff] %v610
        %1123 = vst [vmem:[%s153 + $0xe28] sm:$0xff] %v611
        %1124 = vst [vmem:[%s153 + $0xe30] sm:$0xff] %v612
        %1125 = vst [vmem:[%s153 + $0xe38] sm:$0xff] %v613
        %1126 = vst [vmem:[%s153 + $0xe40] sm:$0xff] %v614
        %1127 = vst [vmem:[%s153 + $0xe48] sm:$0xff] %v615
        %1128 = vst [vmem:[%s153 + $0xe50] sm:$0xff] %v616
        %1129 = vst [vmem:[%s153 + $0xe58] sm:$0xff] %v617
        %1130 = vst [vmem:[%s153 + $0xe60] sm:$0xff] %v618
        %1131 = vst [vmem:[%s153 + $0xe68] sm:$0xff] %v619
        %1132 = vst [vmem:[%s153 + $0xe70] sm:$0xff] %v620
        %1133 = vst [vmem:[%s153 + $0xe78] sm:$0xff] %v621
        %1134 = vst [vmem:[%s153 + $0xe80] sm:$0xff] %v622
        %1135 = vst [vmem:[%s153 + $0xe88] sm:$0xff] %v623
        %1136 = vst [vmem:[%s153 + $0xe90] sm:$0xff] %v624
        %1137 = vst [vmem:[%s153 + $0xe98] sm:$0xff] %v625
        %1138 = vst [vmem:[%s153 + $0xea0] sm:$0xff] %v626
        %1139 = vst [vmem:[%s153 + $0xea8] sm:$0xff] %v627
        %1140 = vst [vmem:[%s153 + $0xeb0] sm:$0xff] %v628
        %1141 = vst [vmem:[%s153 + $0xeb8] sm:$0xff] %v629
        %1142 = vst [vmem:[%s153 + $0xec0] sm:$0xff] %v630
        %1143 = vst [vmem:[%s153 + $0xec8] sm:$0xff] %v631
        %1144 = vst [vmem:[%s153 + $0xed0] sm:$0xff] %v632
        %1145 = vst [vmem:[%s153 + $0xed8] sm:$0xff] %v633
        %1146 = vst [vmem:[%s153 + $0xee0] sm:$0xff] %v634
        %1147 = vst [vmem:[%s153 + $0xee8] sm:$0xff] %v635
        %1148 = vst [vmem:[%s153 + $0xef0] sm:$0xff] %v636
        %1149 = vst [vmem:[%s153 + $0xef8] sm:$0xff] %v637
        %1150 = vst [vmem:[%s153 + $0xf00] sm:$0xff] %v638
        %1151 = vst [vmem:[%s153 + $0xf08] sm:$0xff] %v639
        %1152 = vst [vmem:[%s153 + $0xf10] sm:$0xff] %v640
        %1153 = vst [vmem:[%s153 + $0xf18] sm:$0xff] %v641
        %1154 = vst [vmem:[%s153 + $0xf20] sm:$0xff] %v642
        %1155 = vst [vmem:[%s153 + $0xf28] sm:$0xff] %v643
        %1156 = vst [vmem:[%s153 + $0xf30] sm:$0xff] %v644
        %1157 = vst [vmem:[%s153 + $0xf38] sm:$0xff] %v645
        %1158 = vst [vmem:[%s153 + $0xf40] sm:$0xff] %v646
        %1159 = vst [vmem:[%s153 + $0xf48] sm:$0xff] %v647
        %1160 = vst [vmem:[%s153 + $0xf50] sm:$0xff] %v648
        %1161 = vst [vmem:[%s153 + $0xf58] sm:$0xff] %v649
        %1162 = vst [vmem:[%s153 + $0xf60] sm:$0xff] %v650
        %1163 = vst [vmem:[%s153 + $0xf68] sm:$0xff] %v651
        %1164 = vst [vmem:[%s153 + $0xf70] sm:$0xff] %v652
        %1165 = vst [vmem:[%s153 + $0xf78] sm:$0xff] %v653
        %1166 = vst [vmem:[%s153 + $0xf80] sm:$0xff] %v654
        %1167 = vst [vmem:[%s153 + $0xf88] sm:$0xff] %v655
        %1168 = vst [vmem:[%s153 + $0xf90] sm:$0xff] %v656
        %1169 = vst [vmem:[%s153 + $0xf98] sm:$0xff] %v657
        %1170 = vst [vmem:[%s153 + $0xfa0] sm:$0xff] %v658
        %1171 = vst [vmem:[%s153 + $0xfa8] sm:$0xff] %v659
        %1172 = vst [vmem:[%s153 + $0xfb0] sm:$0xff] %v660
        %1173 = vst [vmem:[%s153 + $0xfb8] sm:$0xff] %v661
        %1174 = vst [vmem:[%s153 + $0xfc0] sm:$0xff] %v662
        %1175 = vst [vmem:[%s153 + $0xfc8] sm:$0xff] %v663
        %1176 = vst [vmem:[%s153 + $0xfd0] sm:$0xff] %v664
        %1177 = vst [vmem:[%s153 + $0xfd8] sm:$0xff] %v665
        %1178 = vst [vmem:[%s153 + $0xfe0] sm:$0xff] %v666
        %1179 = vst [vmem:[%s153 + $0xfe8] sm:$0xff] %v667
        %1180 = vst [vmem:[%s153 + $0xff0] sm:$0xff] %v668
        %1181 = vst [vmem:[%s153 + $0xff8] sm:$0xff] %v669
        %s1182 = sand.u32 %s68, 1
        %s1183 = scalar_lea.sflag [#allocation4], %s1182
        %s1184 = sand.u32 %s68, 1
        %s1185 = smul.addr %s1184, 4096
        %s1186 = scalar_lea.vmem [#allocation5], %s1185
        // Predicated region
        $region29: #{tpu_custom_call.1} parent=23 // pred_check
          %p1187 = pneg %p78
        $region30: #{tpu_custom_call.1} parent=23 // pred_check_branch
          %1189 = sbr.rel (%p1187) target = $region32
        $region31: #{tpu_custom_call.1} parent=23 // pred_region
          %s1190 = smul.u32 64, %s22
          %s1191 = smul.u32 8, %s23
          %s1193 = ssub.s32 65536, 65536
          %1194 = vsyncadd %s1183, %s1193
          %s1195 = smul.addr %s1190, 8
          %s1196 = sadd.s32 %s1191, %s1195
          %s1197 = smul.addr %s1196, 128
          %s1198 = scalar_lea.hbm %s1, %s1197
          %s1199 = sshll.u32 %s1186, 4
          %s1200 = int_to_ptr.vmem [resolvable:$true] %s1199
          %1205 = dma.vmem_to_hbm [thread:$0]  %s1200, 65536, %s1198, %s1183, 1024, 1024, 64
        $region32: #{tpu_custom_call.1} parent=23 // pred_fallthru
          _
      $region24: #{tpu_custom_call.1} parent=5 // pred_fallthru
        _
      %p1206 = scmp.le.s32.totalorder 2, %s13
      // Predicated region
      $region33: #{tpu_custom_call.1} parent=5 // pred_check
        %p1207 = pneg %p1206
      $region34: #{tpu_custom_call.1} parent=5 // pred_check_branch
        %1209 = sbr.rel (%p1207) target = $region36
      $region35: #{tpu_custom_call.1} parent=5 // pred_region
        %s1210 = ssub.s32 %s13, 2
        // Predicated region
        $region37: #{tpu_custom_call.1} parent=35 // pred_check
          %p1211 = pneg %p84
        $region38: #{tpu_custom_call.1} parent=35 // pred_check_branch
          %1213 = sbr.rel (%p1211) target = $region40
        $region39: #{tpu_custom_call.1} parent=35 // pred_region
          %s1214 = sand.u32 %s69, 1
          %s1215 = scalar_lea.sflag [#allocation4], %s1214
          %s1216 = sand.u32 %s69, 1
          %s1217 = smul.addr %s1216, 4096
          %s1218 = scalar_lea.vmem [#allocation5], %s1217
          %1219 = dma.done %s1215, 65536
        $region40: #{tpu_custom_call.1} parent=35 // pred_fallthru
          _
      $region36: #{tpu_custom_call.1} parent=5 // pred_fallthru
        _
    $region6: #{tpu_custom_call.1} parent=1 // loop_footer
      %s17 = sadd.s32 1, %s13
    $region7: #{tpu_custom_call.1} parent=1 // loop_footer_branch
      %12 = sbr.rel target = $region3
    $region8: #{tpu_custom_call.1} parent=1 // loop_exit
      _
    %1220 = vsyncpa [#allocation3], 1
    %s1221 = scalar_lea.sflag [#allocation3], 1
    %1222 = vsyncpa %s1221, 1
    %1223 = vsyncpa [#allocation4], 1
    %s1224 = scalar_lea.sflag [#allocation4], 1
    %1225 = vsyncpa %s1224, 1

</llo_original>
